<compile_context>
chip_gen: v6e
topology: v6e:2x2x1
jax: 0.10.0
libtpu: 0.0.40
codegen_flags: <defaults>
</compile_context>

<pallas_src>
import functools

import jax
import jax.numpy as jnp
from jax.experimental import pallas as pl
from jax.experimental.pallas import tpu as pltpu

NUM_CLASSES = 2
HIDDEN = 128          # fixed by the module definition (Linear(E,128), Linear(128,128))
LANE = 128            # TPU lane width; classifier output is padded to this
BATCH_TILE = 128      # rows per grid step (multiple of 8; >=128 keeps the MXU fed)


def mlp_classifier_kernel(ids_ref, emb_ref, w1_ref, b1_ref, w2_ref, b2_ref,
                          wc_ref, bc_ref, out_ref, *, seq_len, vocab):
    """One batch tile: fused embedding-gather + mean-pool + 3-layer MLP."""
    ids = ids_ref[...]                                   # (TB, L) int32
    tb = ids.shape[0]

    # Fused gather+mean: build per-row token counts over the vocabulary and push the
    # reduction through the MXU as counts @ table:  counts[b, v] = #{l : ids[b, l] == v}.
    # TODO(synk): for large vocabularies a DMA row-gather (scalar-prefetched ids +
    # make_async_copy accumulation) is cheaper than this O(V)-per-row one-hot matmul.
    vocab_iota = jax.lax.broadcasted_iota(jnp.int32, (tb, vocab), 1)
    counts = jnp.zeros((tb, vocab), jnp.float32)
    for l in range(seq_len):                             # static, fully unrolled
        counts = counts + jnp.where(ids[:, l:l + 1] == vocab_iota, 1.0, 0.0)

    emb = emb_ref[...]                                   # (V, E)
    inv_len = jnp.float32(1.0 / seq_len)
    pooled = jnp.dot(counts.astype(emb.dtype), emb,
                     preferred_element_type=jnp.float32) * inv_len     # (TB, E) f32

    # l1 + ReLU (bias add / ReLU in f32)
    h1 = jnp.dot(pooled.astype(w1_ref.dtype), w1_ref[...],
                 preferred_element_type=jnp.float32) + b1_ref[...]
    h1 = jnp.maximum(h1, 0.0)                            # (TB, 128)

    # l2 + ReLU
    h2 = jnp.dot(h1.astype(w2_ref.dtype), w2_ref[...],
                 preferred_element_type=jnp.float32) + b2_ref[...]
    h2 = jnp.maximum(h2, 0.0)                            # (TB, 128)

    # clf (lane-dense padded output, no activation)
    logits = jnp.dot(h2.astype(wc_ref.dtype), wc_ref[...],
                     preferred_element_type=jnp.float32) + bc_ref[...]
    out_ref[...] = logits.astype(out_ref.dtype)          # (TB, LANE)


def mlp_classifier_forward(token_ids, embeddings, params, *,
                           batch_tile=BATCH_TILE, param_dtype=jnp.float32):
    """token_ids: (B, L) int; embeddings: (V, E) float32; params as in make_params."""
    w1, b1, w2, b2, wc, bc = params
    B, L = token_ids.shape
    V, E = embeddings.shape
    H = w1.shape[1]
    n_cls = wc.shape[1]

    # Lane-dense classifier: zero-pad (H, n_cls) -> (H, LANE) and bias -> (1, LANE).
    wc_p = jnp.zeros((H, LANE), jnp.float32).at[:, :n_cls].set(wc)
    bc_p = jnp.zeros((1, LANE), jnp.float32).at[:, :n_cls].set(bc.reshape(1, -1))

    # bf16 (v6e/v7x) or f32 MXU operands; biases stay f32 (post-accumulation adds).
    emb = embeddings.astype(param_dtype)
    w1c = w1.astype(param_dtype)
    w2c = w2.astype(param_dtype)
    wcc = wc_p.astype(param_dtype)
    b1c = b1.reshape(1, -1).astype(jnp.float32)
    b2c = b2.reshape(1, -1).astype(jnp.float32)
    bcc = bc_p.astype(jnp.float32)

    # Pad batch to a multiple of the tile with padding_idx=0 tokens (rows sliced off below).
    tb = batch_tile
    num_tiles = pl.cdiv(B, tb)
    B_pad = num_tiles * tb
    ids = jnp.zeros((B_pad, L), jnp.int32).at[:B, :].set(token_ids.astype(jnp.int32))

    kernel = functools.partial(mlp_classifier_kernel, seq_len=L, vocab=V)
    resident = lambda i: (0, 0)   # table / weights keep the same block across grid steps

    out = pl.pallas_call(
        kernel,
        out_shape=jax.ShapeDtypeStruct((B_pad, LANE), jnp.float32),
        grid=(num_tiles,),
        in_specs=[
            pl.BlockSpec((tb, L), lambda i: (i, 0)),   # token ids, tiled on batch
            pl.BlockSpec((V, E), resident),            # embedding table (VMEM-resident)
            pl.BlockSpec((E, H), resident),            # w1
            pl.BlockSpec((1, H), resident),            # b1
            pl.BlockSpec((H, H), resident),            # w2
            pl.BlockSpec((1, H), resident),            # b2
            pl.BlockSpec((H, LANE), resident),         # wc (lane-padded)
            pl.BlockSpec((1, LANE), resident),         # bc (lane-padded)
        ],
        out_specs=pl.BlockSpec((tb, LANE), lambda i: (i, 0)),
        compiler_params=pltpu.CompilerParams(
            dimension_semantics=("parallel",),
            vmem_limit_bytes=32 * 1024 * 1024,
        ),
    )(ids, emb, w1c, b1c, w2c, b2c, wcc, bcc)

    return out[:B, :n_cls]


def make_params(key, embed_dim):
    """Deterministic synthetic parameters matching the module's shapes."""
    ks = jax.random.split(key, 6)
    w1 = jax.random.normal(ks[0], (embed_dim, HIDDEN), jnp.float32) * 0.05
    b1 = jax.random.normal(ks[1], (1, HIDDEN), jnp.float32) * 0.01
    w2 = jax.random.normal(ks[2], (HIDDEN, HIDDEN), jnp.float32) * 0.05
    b2 = jax.random.normal(ks[3], (1, HIDDEN), jnp.float32) * 0.01
    wc = jax.random.normal(ks[4], (HIDDEN, NUM_CLASSES), jnp.float32) * 0.05
    bc = jax.random.normal(ks[5], (1, NUM_CLASSES), jnp.float32) * 0.01
    return (w1, b1, w2, b2, wc, bc)


def reference_forward(token_ids, embeddings, params):
    """Pure-JAX reference mirroring the PyTorch module."""
    w1, b1, w2, b2, wc, bc = params
    x = jnp.take(embeddings, token_ids, axis=0)      # (B, L, E)
    x = jnp.mean(x, axis=1)                          # AvgPool1d(L) + sum(-1)
    x = jnp.maximum(x @ w1 + b1, 0.0)
    x = jnp.maximum(x @ w2 + b2, 0.0)
    return x @ wc + bc


if __name__ == "__main__":
    key = jax.random.PRNGKey(0)
    k_emb, k_ids, k_par = jax.random.split(key, 3)

    VOCAB, EMBED_DIM = 100, 64
    B, L = 8, 16

    # Pretrained embedding table (padding_idx=0 -> zero row).
    embeddings = jax.random.normal(k_emb, (VOCAB, EMBED_DIM), jnp.float32)
    embeddings = embeddings.at[0].set(0.0)

    token_ids = jax.random.randint(k_ids, (B, L), 0, VOCAB, dtype=jnp.int32)
    params = make_params(k_par, EMBED_DIM)

    ref = reference_forward(token_ids, embeddings, params)

    # f32 path (all generations).
    logits = mlp_classifier_forward(token_ids, embeddings, params)
    logits = jax.block_until_ready(logits)
    assert logits.shape == (B, NUM_CLASSES)
    assert jnp.allclose(logits, ref, atol=5e-3, rtol=5e-3)

    # bf16 weights/embeddings path (v6e/v7x oriented), f32 accumulation + f32 epilogue.
    logits_bf16 = mlp_classifier_forward(token_ids, embeddings, params,
                                         param_dtype=jnp.bfloat16)
    logits_bf16 = jax.block_until_ready(logits_bf16)
    assert logits_bf16.shape == (B, NUM_CLASSES)
    assert jnp.allclose(logits_bf16, ref, atol=3e-2, rtol=3e-2)

    print("KERNEL_OK")
</pallas_src>

<mosaic_0001>
module attributes {stable_mosaic.version = 11 : i64} {
  func.func @mlp_classifier_kernel(%arg0: i32, %arg1: memref<128x16xi32, #tpu.memory_space<vmem>>, %arg2: memref<100x64xf32, #tpu.memory_space<vmem>>, %arg3: memref<64x128xf32, #tpu.memory_space<vmem>>, %arg4: memref<1x128xf32, #tpu.memory_space<vmem>>, %arg5: memref<128x128xf32, #tpu.memory_space<vmem>>, %arg6: memref<1x128xf32, #tpu.memory_space<vmem>>, %arg7: memref<128x128xf32, #tpu.memory_space<vmem>>, %arg8: memref<1x128xf32, #tpu.memory_space<vmem>>, %arg9: memref<128x128xf32, #tpu.memory_space<vmem>>) attributes {dimension_semantics = [#tpu.dimension_semantics<parallel>], iteration_bounds = array<i64: 1>, scalar_prefetch = 0 : i64, scratch_operands = 0 : i64, tpu.core_type = #tpu.core_type<tc>, window_params = [{transform_indices = @transform_0, window_bounds = array<i64: 128, 16>}, {pipeline_mode = #tpu.pipeline_mode<synchronous>, transform_indices = @transform_1, window_bounds = array<i64: 100, 64>}, {pipeline_mode = #tpu.pipeline_mode<synchronous>, transform_indices = @transform_2, window_bounds = array<i64: 64, 128>}, {pipeline_mode = #tpu.pipeline_mode<synchronous>, transform_indices = @transform_3, window_bounds = array<i64: 1, 128>}, {pipeline_mode = #tpu.pipeline_mode<synchronous>, transform_indices = @transform_4, window_bounds = array<i64: 128, 128>}, {pipeline_mode = #tpu.pipeline_mode<synchronous>, transform_indices = @transform_5, window_bounds = array<i64: 1, 128>}, {pipeline_mode = #tpu.pipeline_mode<synchronous>, transform_indices = @transform_6, window_bounds = array<i64: 128, 128>}, {pipeline_mode = #tpu.pipeline_mode<synchronous>, transform_indices = @transform_7, window_bounds = array<i64: 1, 128>}, {transform_indices = @transform_8, window_bounds = array<i64: 128, 128>}]} {
    %c0 = arith.constant 0 : index
    %c0_0 = arith.constant 0 : index
    %0 = vector.load %arg1[%c0, %c0_0] : memref<128x16xi32, #tpu.memory_space<vmem>>, vector<128x16xi32>
    %1 = tpu.iota {dimensions = array<i32: 1>} : vector<128x100xi32>
    %cst = arith.constant 0.000000e+00 : f32
    %2 = vector.broadcast %cst : f32 to vector<128x100xf32>
    %3 = vector.extract_strided_slice %0 {offsets = [0, 0], sizes = [128, 1], strides = [1, 1]} : vector<128x16xi32> to vector<128x1xi32>
    %4 = vector.broadcast %3 : vector<128x1xi32> to vector<128x100xi32>
    %5 = arith.cmpi eq, %4, %1 : vector<128x100xi32>
    %cst_1 = arith.constant 1.000000e+00 : f32
    %cst_2 = arith.constant 0.000000e+00 : f32
    %6 = vector.broadcast %cst_1 : f32 to vector<128x100xf32>
    %7 = vector.broadcast %cst_2 : f32 to vector<128x100xf32>
    %8 = arith.select %5, %6, %7 : vector<128x100xi1>, vector<128x100xf32>
    %9 = arith.addf %2, %8 : vector<128x100xf32>
    %10 = vector.extract_strided_slice %0 {offsets = [0, 1], sizes = [128, 1], strides = [1, 1]} : vector<128x16xi32> to vector<128x1xi32>
    %11 = vector.broadcast %10 : vector<128x1xi32> to vector<128x100xi32>
    %12 = arith.cmpi eq, %11, %1 : vector<128x100xi32>
    %cst_3 = arith.constant 1.000000e+00 : f32
    %cst_4 = arith.constant 0.000000e+00 : f32
    %13 = vector.broadcast %cst_3 : f32 to vector<128x100xf32>
    %14 = vector.broadcast %cst_4 : f32 to vector<128x100xf32>
    %15 = arith.select %12, %13, %14 : vector<128x100xi1>, vector<128x100xf32>
    %16 = arith.addf %9, %15 : vector<128x100xf32>
    %17 = vector.extract_strided_slice %0 {offsets = [0, 2], sizes = [128, 1], strides = [1, 1]} : vector<128x16xi32> to vector<128x1xi32>
    %18 = vector.broadcast %17 : vector<128x1xi32> to vector<128x100xi32>
    %19 = arith.cmpi eq, %18, %1 : vector<128x100xi32>
    %cst_5 = arith.constant 1.000000e+00 : f32
    %cst_6 = arith.constant 0.000000e+00 : f32
    %20 = vector.broadcast %cst_5 : f32 to vector<128x100xf32>
    %21 = vector.broadcast %cst_6 : f32 to vector<128x100xf32>
    %22 = arith.select %19, %20, %21 : vector<128x100xi1>, vector<128x100xf32>
    %23 = arith.addf %16, %22 : vector<128x100xf32>
    %24 = vector.extract_strided_slice %0 {offsets = [0, 3], sizes = [128, 1], strides = [1, 1]} : vector<128x16xi32> to vector<128x1xi32>
    %25 = vector.broadcast %24 : vector<128x1xi32> to vector<128x100xi32>
    %26 = arith.cmpi eq, %25, %1 : vector<128x100xi32>
    %cst_7 = arith.constant 1.000000e+00 : f32
    %cst_8 = arith.constant 0.000000e+00 : f32
    %27 = vector.broadcast %cst_7 : f32 to vector<128x100xf32>
    %28 = vector.broadcast %cst_8 : f32 to vector<128x100xf32>
    %29 = arith.select %26, %27, %28 : vector<128x100xi1>, vector<128x100xf32>
    %30 = arith.addf %23, %29 : vector<128x100xf32>
    %31 = vector.extract_strided_slice %0 {offsets = [0, 4], sizes = [128, 1], strides = [1, 1]} : vector<128x16xi32> to vector<128x1xi32>
    %32 = vector.broadcast %31 : vector<128x1xi32> to vector<128x100xi32>
    %33 = arith.cmpi eq, %32, %1 : vector<128x100xi32>
    %cst_9 = arith.constant 1.000000e+00 : f32
    %cst_10 = arith.constant 0.000000e+00 : f32
    %34 = vector.broadcast %cst_9 : f32 to vector<128x100xf32>
    %35 = vector.broadcast %cst_10 : f32 to vector<128x100xf32>
    %36 = arith.select %33, %34, %35 : vector<128x100xi1>, vector<128x100xf32>
    %37 = arith.addf %30, %36 : vector<128x100xf32>
    %38 = vector.extract_strided_slice %0 {offsets = [0, 5], sizes = [128, 1], strides = [1, 1]} : vector<128x16xi32> to vector<128x1xi32>
    %39 = vector.broadcast %38 : vector<128x1xi32> to vector<128x100xi32>
    %40 = arith.cmpi eq, %39, %1 : vector<128x100xi32>
    %cst_11 = arith.constant 1.000000e+00 : f32
    %cst_12 = arith.constant 0.000000e+00 : f32
    %41 = vector.broadcast %cst_11 : f32 to vector<128x100xf32>
    %42 = vector.broadcast %cst_12 : f32 to vector<128x100xf32>
    %43 = arith.select %40, %41, %42 : vector<128x100xi1>, vector<128x100xf32>
    %44 = arith.addf %37, %43 : vector<128x100xf32>
    %45 = vector.extract_strided_slice %0 {offsets = [0, 6], sizes = [128, 1], strides = [1, 1]} : vector<128x16xi32> to vector<128x1xi32>
    %46 = vector.broadcast %45 : vector<128x1xi32> to vector<128x100xi32>
    %47 = arith.cmpi eq, %46, %1 : vector<128x100xi32>
    %cst_13 = arith.constant 1.000000e+00 : f32
    %cst_14 = arith.constant 0.000000e+00 : f32
    %48 = vector.broadcast %cst_13 : f32 to vector<128x100xf32>
    %49 = vector.broadcast %cst_14 : f32 to vector<128x100xf32>
    %50 = arith.select %47, %48, %49 : vector<128x100xi1>, vector<128x100xf32>
    %51 = arith.addf %44, %50 : vector<128x100xf32>
    %52 = vector.extract_strided_slice %0 {offsets = [0, 7], sizes = [128, 1], strides = [1, 1]} : vector<128x16xi32> to vector<128x1xi32>
    %53 = vector.broadcast %52 : vector<128x1xi32> to vector<128x100xi32>
    %54 = arith.cmpi eq, %53, %1 : vector<128x100xi32>
    %cst_15 = arith.constant 1.000000e+00 : f32
    %cst_16 = arith.constant 0.000000e+00 : f32
    %55 = vector.broadcast %cst_15 : f32 to vector<128x100xf32>
    %56 = vector.broadcast %cst_16 : f32 to vector<128x100xf32>
    %57 = arith.select %54, %55, %56 : vector<128x100xi1>, vector<128x100xf32>
    %58 = arith.addf %51, %57 : vector<128x100xf32>
    %59 = vector.extract_strided_slice %0 {offsets = [0, 8], sizes = [128, 1], strides = [1, 1]} : vector<128x16xi32> to vector<128x1xi32>
    %60 = vector.broadcast %59 : vector<128x1xi32> to vector<128x100xi32>
    %61 = arith.cmpi eq, %60, %1 : vector<128x100xi32>
    %cst_17 = arith.constant 1.000000e+00 : f32
    %cst_18 = arith.constant 0.000000e+00 : f32
    %62 = vector.broadcast %cst_17 : f32 to vector<128x100xf32>
    %63 = vector.broadcast %cst_18 : f32 to vector<128x100xf32>
    %64 = arith.select %61, %62, %63 : vector<128x100xi1>, vector<128x100xf32>
    %65 = arith.addf %58, %64 : vector<128x100xf32>
    %66 = vector.extract_strided_slice %0 {offsets = [0, 9], sizes = [128, 1], strides = [1, 1]} : vector<128x16xi32> to vector<128x1xi32>
    %67 = vector.broadcast %66 : vector<128x1xi32> to vector<128x100xi32>
    %68 = arith.cmpi eq, %67, %1 : vector<128x100xi32>
    %cst_19 = arith.constant 1.000000e+00 : f32
    %cst_20 = arith.constant 0.000000e+00 : f32
    %69 = vector.broadcast %cst_19 : f32 to vector<128x100xf32>
    %70 = vector.broadcast %cst_20 : f32 to vector<128x100xf32>
    %71 = arith.select %68, %69, %70 : vector<128x100xi1>, vector<128x100xf32>
    %72 = arith.addf %65, %71 : vector<128x100xf32>
    %73 = vector.extract_strided_slice %0 {offsets = [0, 10], sizes = [128, 1], strides = [1, 1]} : vector<128x16xi32> to vector<128x1xi32>
    %74 = vector.broadcast %73 : vector<128x1xi32> to vector<128x100xi32>
    %75 = arith.cmpi eq, %74, %1 : vector<128x100xi32>
    %cst_21 = arith.constant 1.000000e+00 : f32
    %cst_22 = arith.constant 0.000000e+00 : f32
    %76 = vector.broadcast %cst_21 : f32 to vector<128x100xf32>
    %77 = vector.broadcast %cst_22 : f32 to vector<128x100xf32>
    %78 = arith.select %75, %76, %77 : vector<128x100xi1>, vector<128x100xf32>
    %79 = arith.addf %72, %78 : vector<128x100xf32>
    %80 = vector.extract_strided_slice %0 {offsets = [0, 11], sizes = [128, 1], strides = [1, 1]} : vector<128x16xi32> to vector<128x1xi32>
    %81 = vector.broadcast %80 : vector<128x1xi32> to vector<128x100xi32>
    %82 = arith.cmpi eq, %81, %1 : vector<128x100xi32>
    %cst_23 = arith.constant 1.000000e+00 : f32
    %cst_24 = arith.constant 0.000000e+00 : f32
    %83 = vector.broadcast %cst_23 : f32 to vector<128x100xf32>
    %84 = vector.broadcast %cst_24 : f32 to vector<128x100xf32>
    %85 = arith.select %82, %83, %84 : vector<128x100xi1>, vector<128x100xf32>
    %86 = arith.addf %79, %85 : vector<128x100xf32>
    %87 = vector.extract_strided_slice %0 {offsets = [0, 12], sizes = [128, 1], strides = [1, 1]} : vector<128x16xi32> to vector<128x1xi32>
    %88 = vector.broadcast %87 : vector<128x1xi32> to vector<128x100xi32>
    %89 = arith.cmpi eq, %88, %1 : vector<128x100xi32>
    %cst_25 = arith.constant 1.000000e+00 : f32
    %cst_26 = arith.constant 0.000000e+00 : f32
    %90 = vector.broadcast %cst_25 : f32 to vector<128x100xf32>
    %91 = vector.broadcast %cst_26 : f32 to vector<128x100xf32>
    %92 = arith.select %89, %90, %91 : vector<128x100xi1>, vector<128x100xf32>
    %93 = arith.addf %86, %92 : vector<128x100xf32>
    %94 = vector.extract_strided_slice %0 {offsets = [0, 13], sizes = [128, 1], strides = [1, 1]} : vector<128x16xi32> to vector<128x1xi32>
    %95 = vector.broadcast %94 : vector<128x1xi32> to vector<128x100xi32>
    %96 = arith.cmpi eq, %95, %1 : vector<128x100xi32>
    %cst_27 = arith.constant 1.000000e+00 : f32
    %cst_28 = arith.constant 0.000000e+00 : f32
    %97 = vector.broadcast %cst_27 : f32 to vector<128x100xf32>
    %98 = vector.broadcast %cst_28 : f32 to vector<128x100xf32>
    %99 = arith.select %96, %97, %98 : vector<128x100xi1>, vector<128x100xf32>
    %100 = arith.addf %93, %99 : vector<128x100xf32>
    %101 = vector.extract_strided_slice %0 {offsets = [0, 14], sizes = [128, 1], strides = [1, 1]} : vector<128x16xi32> to vector<128x1xi32>
    %102 = vector.broadcast %101 : vector<128x1xi32> to vector<128x100xi32>
    %103 = arith.cmpi eq, %102, %1 : vector<128x100xi32>
    %cst_29 = arith.constant 1.000000e+00 : f32
    %cst_30 = arith.constant 0.000000e+00 : f32
    %104 = vector.broadcast %cst_29 : f32 to vector<128x100xf32>
    %105 = vector.broadcast %cst_30 : f32 to vector<128x100xf32>
    %106 = arith.select %103, %104, %105 : vector<128x100xi1>, vector<128x100xf32>
    %107 = arith.addf %100, %106 : vector<128x100xf32>
    %108 = vector.extract_strided_slice %0 {offsets = [0, 15], sizes = [128, 1], strides = [1, 1]} : vector<128x16xi32> to vector<128x1xi32>
    %109 = vector.broadcast %108 : vector<128x1xi32> to vector<128x100xi32>
    %110 = arith.cmpi eq, %109, %1 : vector<128x100xi32>
    %cst_31 = arith.constant 1.000000e+00 : f32
    %cst_32 = arith.constant 0.000000e+00 : f32
    %111 = vector.broadcast %cst_31 : f32 to vector<128x100xf32>
    %112 = vector.broadcast %cst_32 : f32 to vector<128x100xf32>
    %113 = arith.select %110, %111, %112 : vector<128x100xi1>, vector<128x100xf32>
    %114 = arith.addf %107, %113 : vector<128x100xf32>
    %c0_33 = arith.constant 0 : index
    %c0_34 = arith.constant 0 : index
    %115 = vector.load %arg2[%c0_33, %c0_34] : memref<100x64xf32, #tpu.memory_space<vmem>>, vector<100x64xf32>
    %cst_35 = arith.constant dense<0.000000e+00> : vector<128x64xf32>
    %116 = tpu.matmul %114, %115, %cst_35 {dimension_numbers = #tpu.dot_dimension_numbers<[1], [0], [0], [1], [0, 0, 1, 1], [], []>} : vector<128x100xf32>, vector<100x64xf32>, vector<128x64xf32> -> vector<128x64xf32>
    %cst_36 = arith.constant 6.250000e-02 : f32
    %117 = vector.broadcast %cst_36 : f32 to vector<128x64xf32>
    %118 = arith.mulf %116, %117 : vector<128x64xf32>
    %c0_37 = arith.constant 0 : index
    %c0_38 = arith.constant 0 : index
    %119 = vector.load %arg3[%c0_37, %c0_38] : memref<64x128xf32, #tpu.memory_space<vmem>>, vector<64x128xf32>
    %cst_39 = arith.constant dense<0.000000e+00> : vector<128x128xf32>
    %120 = tpu.matmul %118, %119, %cst_39 {dimension_numbers = #tpu.dot_dimension_numbers<[1], [0], [0], [1], [0, 0, 1, 1], [], []>} : vector<128x64xf32>, vector<64x128xf32>, vector<128x128xf32> -> vector<128x128xf32>
    %c0_40 = arith.constant 0 : index
    %c0_41 = arith.constant 0 : index
    %121 = vector.load %arg4[%c0_40, %c0_41] : memref<1x128xf32, #tpu.memory_space<vmem>>, vector<1x128xf32>
    %122 = vector.broadcast %121 : vector<1x128xf32> to vector<128x128xf32>
    %123 = arith.addf %120, %122 : vector<128x128xf32>
    %cst_42 = arith.constant 0.000000e+00 : f32
    %124 = vector.broadcast %cst_42 : f32 to vector<128x128xf32>
    %125 = arith.maximumf %123, %124 : vector<128x128xf32>
    %c0_43 = arith.constant 0 : index
    %c0_44 = arith.constant 0 : index
    %126 = vector.load %arg5[%c0_43, %c0_44] : memref<128x128xf32, #tpu.memory_space<vmem>>, vector<128x128xf32>
    %cst_45 = arith.constant dense<0.000000e+00> : vector<128x128xf32>
    %127 = tpu.matmul %125, %126, %cst_45 {dimension_numbers = #tpu.dot_dimension_numbers<[1], [0], [0], [1], [0, 0, 1, 1], [], []>} : vector<128x128xf32>, vector<128x128xf32>, vector<128x128xf32> -> vector<128x128xf32>
    %c0_46 = arith.constant 0 : index
    %c0_47 = arith.constant 0 : index
    %128 = vector.load %arg6[%c0_46, %c0_47] : memref<1x128xf32, #tpu.memory_space<vmem>>, vector<1x128xf32>
    %129 = vector.broadcast %128 : vector<1x128xf32> to vector<128x128xf32>
    %130 = arith.addf %127, %129 : vector<128x128xf32>
    %cst_48 = arith.constant 0.000000e+00 : f32
    %131 = vector.broadcast %cst_48 : f32 to vector<128x128xf32>
    %132 = arith.maximumf %130, %131 : vector<128x128xf32>
    %c0_49 = arith.constant 0 : index
    %c0_50 = arith.constant 0 : index
    %133 = vector.load %arg7[%c0_49, %c0_50] : memref<128x128xf32, #tpu.memory_space<vmem>>, vector<128x128xf32>
    %cst_51 = arith.constant dense<0.000000e+00> : vector<128x128xf32>
    %134 = tpu.matmul %132, %133, %cst_51 {dimension_numbers = #tpu.dot_dimension_numbers<[1], [0], [0], [1], [0, 0, 1, 1], [], []>} : vector<128x128xf32>, vector<128x128xf32>, vector<128x128xf32> -> vector<128x128xf32>
    %c0_52 = arith.constant 0 : index
    %c0_53 = arith.constant 0 : index
    %135 = vector.load %arg8[%c0_52, %c0_53] : memref<1x128xf32, #tpu.memory_space<vmem>>, vector<1x128xf32>
    %136 = vector.broadcast %135 : vector<1x128xf32> to vector<128x128xf32>
    %137 = arith.addf %134, %136 : vector<128x128xf32>
    %c0_54 = arith.constant 0 : index
    %c0_55 = arith.constant 0 : index
    %138 = vector.load %arg9[%c0_54, %c0_55] : memref<128x128xf32, #tpu.memory_space<vmem>>, vector<128x128xf32>
    tpu.vector_store %arg9[%c0_54, %c0_55], %137 {strides = array<i32>} : memref<128x128xf32, #tpu.memory_space<vmem>>, vector<128x128xf32>,
    return
  }
  func.func @transform_0(%arg0: i32) -> (i32, i32) {
    %c0_i32 = arith.constant 0 : i32
    %c0_i32_0 = arith.constant 0 : i32
    return %arg0, %c0_i32 : i32, i32
  }
  func.func @transform_1(%arg0: i32) -> (i32, i32) {
    %c0_i32 = arith.constant 0 : i32
    %c0_i32_0 = arith.constant 0 : i32
    %c0_i32_1 = arith.constant 0 : i32
    return %c0_i32, %c0_i32_0 : i32, i32
  }
  func.func @transform_2(%arg0: i32) -> (i32, i32) {
    %c0_i32 = arith.constant 0 : i32
    %c0_i32_0 = arith.constant 0 : i32
    %c0_i32_1 = arith.constant 0 : i32
    return %c0_i32, %c0_i32_0 : i32, i32
  }
  func.func @transform_3(%arg0: i32) -> (i32, i32) {
    %c0_i32 = arith.constant 0 : i32
    %c0_i32_0 = arith.constant 0 : i32
    %c0_i32_1 = arith.constant 0 : i32
    return %c0_i32, %c0_i32_0 : i32, i32
  }
  func.func @transform_4(%arg0: i32) -> (i32, i32) {
    %c0_i32 = arith.constant 0 : i32
    %c0_i32_0 = arith.constant 0 : i32
    %c0_i32_1 = arith.constant 0 : i32
    return %c0_i32, %c0_i32_0 : i32, i32
  }
  func.func @transform_5(%arg0: i32) -> (i32, i32) {
    %c0_i32 = arith.constant 0 : i32
    %c0_i32_0 = arith.constant 0 : i32
    %c0_i32_1 = arith.constant 0 : i32
    return %c0_i32, %c0_i32_0 : i32, i32
  }
  func.func @transform_6(%arg0: i32) -> (i32, i32) {
    %c0_i32 = arith.constant 0 : i32
    %c0_i32_0 = arith.constant 0 : i32
    %c0_i32_1 = arith.constant 0 : i32
    return %c0_i32, %c0_i32_0 : i32, i32
  }
  func.func @transform_7(%arg0: i32) -> (i32, i32) {
    %c0_i32 = arith.constant 0 : i32
    %c0_i32_0 = arith.constant 0 : i32
    %c0_i32_1 = arith.constant 0 : i32
    return %c0_i32, %c0_i32_0 : i32, i32
  }
  func.func @transform_8(%arg0: i32) -> (i32, i32) {
    %c0_i32 = arith.constant 0 : i32
    %c0_i32_0 = arith.constant 0 : i32
    return %arg0, %c0_i32 : i32, i32
  }
}

</mosaic_0001>

<llo_original>
// kernel: tpu_custom_call.1
$region0: #{tpu_custom_call.1}
  #allocation0 [shape = 'u32[]', space=smem, size = 0x4, offset = 0x4, fixed_abs, tag = 'smem constant byte address 0x4 - core index']
  #allocation1 [shape = 'u32[144,128]{1,0:T(1,128)}', space=vmem, size = 0x12000, scoped, tag = 'internal scratch']
  %s0 = inlined_call_operand.vmem [shape: s32[128,16], index: 0, kind: input, shape index: {}]
  %s1 = inlined_call_operand.vmem [shape: f32[100,64], index: 1, kind: input, shape index: {}]
  %s2 = inlined_call_operand.hbm [shape: f32[64,128], index: 2, kind: input, shape index: {}]
  %s3 = inlined_call_operand.vmem [shape: f32[1,128], index: 3, kind: input, shape index: {}]
  %s4 = inlined_call_operand.vmem [shape: f32[128,128], index: 4, kind: input, shape index: {}]
  %s5 = inlined_call_operand.vmem [shape: f32[1,128], index: 5, kind: input, shape index: {}]
  %s6 = inlined_call_operand.vmem [shape: f32[128,128], index: 6, kind: input, shape index: {}]
  %s7 = inlined_call_operand.vmem [shape: f32[1,128], index: 7, kind: input, shape index: {}]
  %s8 = inlined_call_operand.hbm [shape: f32[128,128], index: 8, kind: output, shape index: {}]
  %s9 = sld [smem:[#allocation0]]
  $region46: #{tpu_custom_call.1} parent=0
    _
  %s11 = ssub.s32 1, %s9
  %s12 = scalar_select 0, %s11, %s9
  $region1: #{tpu_custom_call.1} parent=0
    #allocation2 [shape = 'u8[32768]{0}', space=vmem, size = 0x8000, scoped, tag = 'input window, operand 2, single buffered']
    #allocation3 [shape = 's32[1]{0}', space=sflag, size = 0x4, scoped, tag = 'scoped memory for tpu_custom_call.1']
    #allocation4 [shape = 's32[1]{0}', space=sflag, size = 0x4, scoped, tag = 'scoped memory for tpu_custom_call.1']
    #allocation5 [shape = 'u8[65536]{0}', space=vmem, size = 0x10000, scoped, tag = 'output window, operand 0, single buffered']
    %13 = vsyncpa [#allocation3], 0
    %14 = vsyncpa [#allocation4], 0
    // Predicated region
    $region2: #{tpu_custom_call.1} parent=1 // pred_check
      _
    $region3: #{tpu_custom_call.1} parent=1 // pred_check_branch
      %16 = sbr.rel (0) target = $region5
    $region4: #{tpu_custom_call.1} parent=1 // pred_region
      _
    $region5: #{tpu_custom_call.1} parent=1 // pred_fallthru
      _
    // Predicated region
    $region6: #{tpu_custom_call.1} parent=1 // pred_check
      _
    $region7: #{tpu_custom_call.1} parent=1 // pred_check_branch
      %18 = sbr.rel (0) target = $region9
    $region8: #{tpu_custom_call.1} parent=1 // pred_region
      _
    $region9: #{tpu_custom_call.1} parent=1 // pred_fallthru
      _
    // Predicated region
    $region10: #{tpu_custom_call.1} parent=1 // pred_check
      _
    $region11: #{tpu_custom_call.1} parent=1 // pred_check_branch
      %20 = sbr.rel (0) target = $region13
    $region12: #{tpu_custom_call.1} parent=1 // pred_region
      %s22 = ssub.s32 1024, 1024
      %23 = vsyncadd [#allocation3], %s22
      %s24 = sshll.u32 [#allocation2], 4
      %s25 = int_to_ptr.vmem [resolvable:$true] %s24
      %30 = dma.hbm_to_vmem [thread:$0]  %s2, 1024, %s25, [#allocation3], 128, 128, 8
    $region13: #{tpu_custom_call.1} parent=1 // pred_fallthru
      _
    // Predicated region
    $region14: #{tpu_custom_call.1} parent=1 // pred_check
      _
    $region15: #{tpu_custom_call.1} parent=1 // pred_check_branch
      %32 = sbr.rel (0) target = $region17
    $region16: #{tpu_custom_call.1} parent=1 // pred_region
      _
    $region17: #{tpu_custom_call.1} parent=1 // pred_fallthru
      _
    // Predicated region
    $region18: #{tpu_custom_call.1} parent=1 // pred_check
      _
    $region19: #{tpu_custom_call.1} parent=1 // pred_check_branch
      %34 = sbr.rel (0) target = $region21
    $region20: #{tpu_custom_call.1} parent=1 // pred_region
      _
    $region21: #{tpu_custom_call.1} parent=1 // pred_fallthru
      _
    // Predicated region
    $region22: #{tpu_custom_call.1} parent=1 // pred_check
      _
    $region23: #{tpu_custom_call.1} parent=1 // pred_check_branch
      %36 = sbr.rel (0) target = $region25
    $region24: #{tpu_custom_call.1} parent=1 // pred_region
      _
    $region25: #{tpu_custom_call.1} parent=1 // pred_fallthru
      _
    // Predicated region
    $region26: #{tpu_custom_call.1} parent=1 // pred_check
      _
    $region27: #{tpu_custom_call.1} parent=1 // pred_check_branch
      %38 = sbr.rel (0) target = $region29
    $region28: #{tpu_custom_call.1} parent=1 // pred_region
      _
    $region29: #{tpu_custom_call.1} parent=1 // pred_fallthru
      _
    // Predicated region
    $region30: #{tpu_custom_call.1} parent=1 // pred_check
      _
    $region31: #{tpu_custom_call.1} parent=1 // pred_check_branch
      %40 = sbr.rel (0) target = $region33
    $region32: #{tpu_custom_call.1} parent=1 // pred_region
      _
    $region33: #{tpu_custom_call.1} parent=1 // pred_fallthru
      _
    // Predicated region
    $region34: #{tpu_custom_call.1} parent=1 // pred_check
      _
    $region35: #{tpu_custom_call.1} parent=1 // pred_check_branch
      %42 = sbr.rel (0) target = $region37
    $region36: #{tpu_custom_call.1} parent=1 // pred_region
      %43 = dma.done [#allocation3], 1024
    $region37: #{tpu_custom_call.1} parent=1 // pred_fallthru
      _
    %v44 = vld [vmem:[%s0] sm:$0xff]
    %v45 = vld [vmem:[%s0 + $0x8] sm:$0xff]
    %v46 = vld [vmem:[%s0 + $0x10] sm:$0xff]
    %v47 = vld [vmem:[%s0 + $0x18] sm:$0xff]
    %v48 = vld [vmem:[%s0 + $0x20] sm:$0xff]
    %v49 = vld [vmem:[%s0 + $0x28] sm:$0xff]
    %v50 = vld [vmem:[%s0 + $0x30] sm:$0xff]
    %v51 = vld [vmem:[%s0 + $0x38] sm:$0xff]
    %v52 = vld [vmem:[%s0 + $0x40] sm:$0xff]
    %v53 = vld [vmem:[%s0 + $0x48] sm:$0xff]
    %v54 = vld [vmem:[%s0 + $0x50] sm:$0xff]
    %v55 = vld [vmem:[%s0 + $0x58] sm:$0xff]
    %v56 = vld [vmem:[%s0 + $0x60] sm:$0xff]
    %v57 = vld [vmem:[%s0 + $0x68] sm:$0xff]
    %v58 = vld [vmem:[%s0 + $0x70] sm:$0xff]
    %v59 = vld [vmem:[%s0 + $0x78] sm:$0xff]
    %v60 = vlaneseq
    %v61 = vand.u32 %v60, 127
    %62 = vset.pattern.permute.xlu0 0
    %63 = vperm.xlu0 %62, %v44
    %v64 = vpop.permute.xlu0 %63
    %65 = vset.pattern.permute.xlu0 0
    %66 = vperm.xlu0 %65, %v45
    %v67 = vpop.permute.xlu0 %66
    %68 = vset.pattern.permute.xlu0 0
    %69 = vperm.xlu0 %68, %v46
    %v70 = vpop.permute.xlu0 %69
    %71 = vset.pattern.permute.xlu0 0
    %72 = vperm.xlu0 %71, %v47
    %v73 = vpop.permute.xlu0 %72
    %74 = vset.pattern.permute.xlu0 0
    %75 = vperm.xlu0 %74, %v48
    %v76 = vpop.permute.xlu0 %75
    %77 = vset.pattern.permute.xlu0 0
    %78 = vperm.xlu0 %77, %v49
    %v79 = vpop.permute.xlu0 %78
    %80 = vset.pattern.permute.xlu0 0
    %81 = vperm.xlu0 %80, %v50
    %v82 = vpop.permute.xlu0 %81
    %83 = vset.pattern.permute.xlu0 0
    %84 = vperm.xlu0 %83, %v51
    %v85 = vpop.permute.xlu0 %84
    %86 = vset.pattern.permute.xlu0 0
    %87 = vperm.xlu0 %86, %v52
    %v88 = vpop.permute.xlu0 %87
    %89 = vset.pattern.permute.xlu0 0
    %90 = vperm.xlu0 %89, %v53
    %v91 = vpop.permute.xlu0 %90
    %92 = vset.pattern.permute.xlu0 0
    %93 = vperm.xlu0 %92, %v54
    %v94 = vpop.permute.xlu0 %93
    %95 = vset.pattern.permute.xlu0 0
    %96 = vperm.xlu0 %95, %v55
    %v97 = vpop.permute.xlu0 %96
    %98 = vset.pattern.permute.xlu0 0
    %99 = vperm.xlu0 %98, %v56
    %v100 = vpop.permute.xlu0 %99
    %101 = vset.pattern.permute.xlu0 0
    %102 = vperm.xlu0 %101, %v57
    %v103 = vpop.permute.xlu0 %102
    %104 = vset.pattern.permute.xlu0 0
    %105 = vperm.xlu0 %104, %v58
    %v106 = vpop.permute.xlu0 %105
    %107 = vset.pattern.permute.xlu0 0
    %108 = vperm.xlu0 %107, %v59
    %v109 = vpop.permute.xlu0 %108
    %vm110 = vcmp.eq.s32.totalorder %v64, %v61
    %vm111 = vcmp.eq.s32.totalorder %v67, %v61
    %vm112 = vcmp.eq.s32.totalorder %v70, %v61
    %vm113 = vcmp.eq.s32.totalorder %v73, %v61
    %vm114 = vcmp.eq.s32.totalorder %v76, %v61
    %vm115 = vcmp.eq.s32.totalorder %v79, %v61
    %vm116 = vcmp.eq.s32.totalorder %v82, %v61
    %vm117 = vcmp.eq.s32.totalorder %v85, %v61
    %vm118 = vcmp.eq.s32.totalorder %v88, %v61
    %vm119 = vcmp.eq.s32.totalorder %v91, %v61
    %vm120 = vcmp.eq.s32.totalorder %v94, %v61
    %vm121 = vcmp.eq.s32.totalorder %v97, %v61
    %vm122 = vcmp.eq.s32.totalorder %v100, %v61
    %vm123 = vcmp.eq.s32.totalorder %v103, %v61
    %vm124 = vcmp.eq.s32.totalorder %v106, %v61
    %vm125 = vcmp.eq.s32.totalorder %v109, %v61
    %v126 = vsel %vm110, 1.0, 0.0
    %v127 = vsel %vm111, 1.0, 0.0
    %v128 = vsel %vm112, 1.0, 0.0
    %v129 = vsel %vm113, 1.0, 0.0
    %v130 = vsel %vm114, 1.0, 0.0
    %v131 = vsel %vm115, 1.0, 0.0
    %v132 = vsel %vm116, 1.0, 0.0
    %v133 = vsel %vm117, 1.0, 0.0
    %v134 = vsel %vm118, 1.0, 0.0
    %v135 = vsel %vm119, 1.0, 0.0
    %v136 = vsel %vm120, 1.0, 0.0
    %v137 = vsel %vm121, 1.0, 0.0
    %v138 = vsel %vm122, 1.0, 0.0
    %v139 = vsel %vm123, 1.0, 0.0
    %v140 = vsel %vm124, 1.0, 0.0
    %v141 = vsel %vm125, 1.0, 0.0
    %v142 = vadd.f32 %v126, 0.0
    %v143 = vadd.f32 %v127, 0.0
    %v144 = vadd.f32 %v128, 0.0
    %v145 = vadd.f32 %v129, 0.0
    %v146 = vadd.f32 %v130, 0.0
    %v147 = vadd.f32 %v131, 0.0
    %v148 = vadd.f32 %v132, 0.0
    %v149 = vadd.f32 %v133, 0.0
    %v150 = vadd.f32 %v134, 0.0
    %v151 = vadd.f32 %v135, 0.0
    %v152 = vadd.f32 %v136, 0.0
    %v153 = vadd.f32 %v137, 0.0
    %v154 = vadd.f32 %v138, 0.0
    %v155 = vadd.f32 %v139, 0.0
    %v156 = vadd.f32 %v140, 0.0
    %v157 = vadd.f32 %v141, 0.0
    %158 = vset.pattern.permute.xlu0 1
    %159 = vperm.xlu0 %158, %v44
    %v160 = vpop.permute.xlu0 %159
    %161 = vset.pattern.permute.xlu0 1
    %162 = vperm.xlu0 %161, %v45
    %v163 = vpop.permute.xlu0 %162
    %164 = vset.pattern.permute.xlu0 1
    %165 = vperm.xlu0 %164, %v46
    %v166 = vpop.permute.xlu0 %165
    %167 = vset.pattern.permute.xlu0 1
    %168 = vperm.xlu0 %167, %v47
    %v169 = vpop.permute.xlu0 %168
    %170 = vset.pattern.permute.xlu0 1
    %171 = vperm.xlu0 %170, %v48
    %v172 = vpop.permute.xlu0 %171
    %173 = vset.pattern.permute.xlu0 1
    %174 = vperm.xlu0 %173, %v49
    %v175 = vpop.permute.xlu0 %174
    %176 = vset.pattern.permute.xlu0 1
    %177 = vperm.xlu0 %176, %v50
    %v178 = vpop.permute.xlu0 %177
    %179 = vset.pattern.permute.xlu0 1
    %180 = vperm.xlu0 %179, %v51
    %v181 = vpop.permute.xlu0 %180
    %182 = vset.pattern.permute.xlu0 1
    %183 = vperm.xlu0 %182, %v52
    %v184 = vpop.permute.xlu0 %183
    %185 = vset.pattern.permute.xlu0 1
    %186 = vperm.xlu0 %185, %v53
    %v187 = vpop.permute.xlu0 %186
    %188 = vset.pattern.permute.xlu0 1
    %189 = vperm.xlu0 %188, %v54
    %v190 = vpop.permute.xlu0 %189
    %191 = vset.pattern.permute.xlu0 1
    %192 = vperm.xlu0 %191, %v55
    %v193 = vpop.permute.xlu0 %192
    %194 = vset.pattern.permute.xlu0 1
    %195 = vperm.xlu0 %194, %v56
    %v196 = vpop.permute.xlu0 %195
    %197 = vset.pattern.permute.xlu0 1
    %198 = vperm.xlu0 %197, %v57
    %v199 = vpop.permute.xlu0 %198
    %200 = vset.pattern.permute.xlu0 1
    %201 = vperm.xlu0 %200, %v58
    %v202 = vpop.permute.xlu0 %201
    %203 = vset.pattern.permute.xlu0 1
    %204 = vperm.xlu0 %203, %v59
    %v205 = vpop.permute.xlu0 %204
    %vm206 = vcmp.eq.s32.totalorder %v160, %v61
    %vm207 = vcmp.eq.s32.totalorder %v163, %v61
    %vm208 = vcmp.eq.s32.totalorder %v166, %v61
    %vm209 = vcmp.eq.s32.totalorder %v169, %v61
    %vm210 = vcmp.eq.s32.totalorder %v172, %v61
    %vm211 = vcmp.eq.s32.totalorder %v175, %v61
    %vm212 = vcmp.eq.s32.totalorder %v178, %v61
    %vm213 = vcmp.eq.s32.totalorder %v181, %v61
    %vm214 = vcmp.eq.s32.totalorder %v184, %v61
    %vm215 = vcmp.eq.s32.totalorder %v187, %v61
    %vm216 = vcmp.eq.s32.totalorder %v190, %v61
    %vm217 = vcmp.eq.s32.totalorder %v193, %v61
    %vm218 = vcmp.eq.s32.totalorder %v196, %v61
    %vm219 = vcmp.eq.s32.totalorder %v199, %v61
    %vm220 = vcmp.eq.s32.totalorder %v202, %v61
    %vm221 = vcmp.eq.s32.totalorder %v205, %v61
    %v222 = vsel %vm206, 1.0, 0.0
    %v223 = vsel %vm207, 1.0, 0.0
    %v224 = vsel %vm208, 1.0, 0.0
    %v225 = vsel %vm209, 1.0, 0.0
    %v226 = vsel %vm210, 1.0, 0.0
    %v227 = vsel %vm211, 1.0, 0.0
    %v228 = vsel %vm212, 1.0, 0.0
    %v229 = vsel %vm213, 1.0, 0.0
    %v230 = vsel %vm214, 1.0, 0.0
    %v231 = vsel %vm215, 1.0, 0.0
    %v232 = vsel %vm216, 1.0, 0.0
    %v233 = vsel %vm217, 1.0, 0.0
    %v234 = vsel %vm218, 1.0, 0.0
    %v235 = vsel %vm219, 1.0, 0.0
    %v236 = vsel %vm220, 1.0, 0.0
    %v237 = vsel %vm221, 1.0, 0.0
    %v238 = vadd.f32 %v142, %v222
    %v239 = vadd.f32 %v143, %v223
    %v240 = vadd.f32 %v144, %v224
    %v241 = vadd.f32 %v145, %v225
    %v242 = vadd.f32 %v146, %v226
    %v243 = vadd.f32 %v147, %v227
    %v244 = vadd.f32 %v148, %v228
    %v245 = vadd.f32 %v149, %v229
    %v246 = vadd.f32 %v150, %v230
    %v247 = vadd.f32 %v151, %v231
    %v248 = vadd.f32 %v152, %v232
    %v249 = vadd.f32 %v153, %v233
    %v250 = vadd.f32 %v154, %v234
    %v251 = vadd.f32 %v155, %v235
    %v252 = vadd.f32 %v156, %v236
    %v253 = vadd.f32 %v157, %v237
    %254 = vset.pattern.permute.xlu0 2
    %255 = vperm.xlu0 %254, %v44
    %v256 = vpop.permute.xlu0 %255
    %257 = vset.pattern.permute.xlu0 2
    %258 = vperm.xlu0 %257, %v45
    %v259 = vpop.permute.xlu0 %258
    %260 = vset.pattern.permute.xlu0 2
    %261 = vperm.xlu0 %260, %v46
    %v262 = vpop.permute.xlu0 %261
    %263 = vset.pattern.permute.xlu0 2
    %264 = vperm.xlu0 %263, %v47
    %v265 = vpop.permute.xlu0 %264
    %266 = vset.pattern.permute.xlu0 2
    %267 = vperm.xlu0 %266, %v48
    %v268 = vpop.permute.xlu0 %267
    %269 = vset.pattern.permute.xlu0 2
    %270 = vperm.xlu0 %269, %v49
    %v271 = vpop.permute.xlu0 %270
    %272 = vset.pattern.permute.xlu0 2
    %273 = vperm.xlu0 %272, %v50
    %v274 = vpop.permute.xlu0 %273
    %275 = vset.pattern.permute.xlu0 2
    %276 = vperm.xlu0 %275, %v51
    %v277 = vpop.permute.xlu0 %276
    %278 = vset.pattern.permute.xlu0 2
    %279 = vperm.xlu0 %278, %v52
    %v280 = vpop.permute.xlu0 %279
    %281 = vset.pattern.permute.xlu0 2
    %282 = vperm.xlu0 %281, %v53
    %v283 = vpop.permute.xlu0 %282
    %284 = vset.pattern.permute.xlu0 2
    %285 = vperm.xlu0 %284, %v54
    %v286 = vpop.permute.xlu0 %285
    %287 = vset.pattern.permute.xlu0 2
    %288 = vperm.xlu0 %287, %v55
    %v289 = vpop.permute.xlu0 %288
    %290 = vset.pattern.permute.xlu0 2
    %291 = vperm.xlu0 %290, %v56
    %v292 = vpop.permute.xlu0 %291
    %293 = vset.pattern.permute.xlu0 2
    %294 = vperm.xlu0 %293, %v57
    %v295 = vpop.permute.xlu0 %294
    %296 = vset.pattern.permute.xlu0 2
    %297 = vperm.xlu0 %296, %v58
    %v298 = vpop.permute.xlu0 %297
    %299 = vset.pattern.permute.xlu0 2
    %300 = vperm.xlu0 %299, %v59
    %v301 = vpop.permute.xlu0 %300
    %vm302 = vcmp.eq.s32.totalorder %v256, %v61
    %vm303 = vcmp.eq.s32.totalorder %v259, %v61
    %vm304 = vcmp.eq.s32.totalorder %v262, %v61
    %vm305 = vcmp.eq.s32.totalorder %v265, %v61
    %vm306 = vcmp.eq.s32.totalorder %v268, %v61
    %vm307 = vcmp.eq.s32.totalorder %v271, %v61
    %vm308 = vcmp.eq.s32.totalorder %v274, %v61
    %vm309 = vcmp.eq.s32.totalorder %v277, %v61
    %vm310 = vcmp.eq.s32.totalorder %v280, %v61
    %vm311 = vcmp.eq.s32.totalorder %v283, %v61
    %vm312 = vcmp.eq.s32.totalorder %v286, %v61
    %vm313 = vcmp.eq.s32.totalorder %v289, %v61
    %vm314 = vcmp.eq.s32.totalorder %v292, %v61
    %vm315 = vcmp.eq.s32.totalorder %v295, %v61
    %vm316 = vcmp.eq.s32.totalorder %v298, %v61
    %vm317 = vcmp.eq.s32.totalorder %v301, %v61
    %v318 = vsel %vm302, 1.0, 0.0
    %v319 = vsel %vm303, 1.0, 0.0
    %v320 = vsel %vm304, 1.0, 0.0
    %v321 = vsel %vm305, 1.0, 0.0
    %v322 = vsel %vm306, 1.0, 0.0
    %v323 = vsel %vm307, 1.0, 0.0
    %v324 = vsel %vm308, 1.0, 0.0
    %v325 = vsel %vm309, 1.0, 0.0
    %v326 = vsel %vm310, 1.0, 0.0
    %v327 = vsel %vm311, 1.0, 0.0
    %v328 = vsel %vm312, 1.0, 0.0
    %v329 = vsel %vm313, 1.0, 0.0
    %v330 = vsel %vm314, 1.0, 0.0
    %v331 = vsel %vm315, 1.0, 0.0
    %v332 = vsel %vm316, 1.0, 0.0
    %v333 = vsel %vm317, 1.0, 0.0
    %v334 = vadd.f32 %v238, %v318
    %v335 = vadd.f32 %v239, %v319
    %v336 = vadd.f32 %v240, %v320
    %v337 = vadd.f32 %v241, %v321
    %v338 = vadd.f32 %v242, %v322
    %v339 = vadd.f32 %v243, %v323
    %v340 = vadd.f32 %v244, %v324
    %v341 = vadd.f32 %v245, %v325
    %v342 = vadd.f32 %v246, %v326
    %v343 = vadd.f32 %v247, %v327
    %v344 = vadd.f32 %v248, %v328
    %v345 = vadd.f32 %v249, %v329
    %v346 = vadd.f32 %v250, %v330
    %v347 = vadd.f32 %v251, %v331
    %v348 = vadd.f32 %v252, %v332
    %v349 = vadd.f32 %v253, %v333
    %350 = vset.pattern.permute.xlu0 3
    %351 = vperm.xlu0 %350, %v44
    %v352 = vpop.permute.xlu0 %351
    %353 = vset.pattern.permute.xlu0 3
    %354 = vperm.xlu0 %353, %v45
    %v355 = vpop.permute.xlu0 %354
    %356 = vset.pattern.permute.xlu0 3
    %357 = vperm.xlu0 %356, %v46
    %v358 = vpop.permute.xlu0 %357
    %359 = vset.pattern.permute.xlu0 3
    %360 = vperm.xlu0 %359, %v47
    %v361 = vpop.permute.xlu0 %360
    %362 = vset.pattern.permute.xlu0 3
    %363 = vperm.xlu0 %362, %v48
    %v364 = vpop.permute.xlu0 %363
    %365 = vset.pattern.permute.xlu0 3
    %366 = vperm.xlu0 %365, %v49
    %v367 = vpop.permute.xlu0 %366
    %368 = vset.pattern.permute.xlu0 3
    %369 = vperm.xlu0 %368, %v50
    %v370 = vpop.permute.xlu0 %369
    %371 = vset.pattern.permute.xlu0 3
    %372 = vperm.xlu0 %371, %v51
    %v373 = vpop.permute.xlu0 %372
    %374 = vset.pattern.permute.xlu0 3
    %375 = vperm.xlu0 %374, %v52
    %v376 = vpop.permute.xlu0 %375
    %377 = vset.pattern.permute.xlu0 3
    %378 = vperm.xlu0 %377, %v53
    %v379 = vpop.permute.xlu0 %378
    %380 = vset.pattern.permute.xlu0 3
    %381 = vperm.xlu0 %380, %v54
    %v382 = vpop.permute.xlu0 %381
    %383 = vset.pattern.permute.xlu0 3
    %384 = vperm.xlu0 %383, %v55
    %v385 = vpop.permute.xlu0 %384
    %386 = vset.pattern.permute.xlu0 3
    %387 = vperm.xlu0 %386, %v56
    %v388 = vpop.permute.xlu0 %387
    %389 = vset.pattern.permute.xlu0 3
    %390 = vperm.xlu0 %389, %v57
    %v391 = vpop.permute.xlu0 %390
    %392 = vset.pattern.permute.xlu0 3
    %393 = vperm.xlu0 %392, %v58
    %v394 = vpop.permute.xlu0 %393
    %395 = vset.pattern.permute.xlu0 3
    %396 = vperm.xlu0 %395, %v59
    %v397 = vpop.permute.xlu0 %396
    %vm398 = vcmp.eq.s32.totalorder %v352, %v61
    %vm399 = vcmp.eq.s32.totalorder %v355, %v61
    %vm400 = vcmp.eq.s32.totalorder %v358, %v61
    %vm401 = vcmp.eq.s32.totalorder %v361, %v61
    %vm402 = vcmp.eq.s32.totalorder %v364, %v61
    %vm403 = vcmp.eq.s32.totalorder %v367, %v61
    %vm404 = vcmp.eq.s32.totalorder %v370, %v61
    %vm405 = vcmp.eq.s32.totalorder %v373, %v61
    %vm406 = vcmp.eq.s32.totalorder %v376, %v61
    %vm407 = vcmp.eq.s32.totalorder %v379, %v61
    %vm408 = vcmp.eq.s32.totalorder %v382, %v61
    %vm409 = vcmp.eq.s32.totalorder %v385, %v61
    %vm410 = vcmp.eq.s32.totalorder %v388, %v61
    %vm411 = vcmp.eq.s32.totalorder %v391, %v61
    %vm412 = vcmp.eq.s32.totalorder %v394, %v61
    %vm413 = vcmp.eq.s32.totalorder %v397, %v61
    %v414 = vsel %vm398, 1.0, 0.0
    %v415 = vsel %vm399, 1.0, 0.0
    %v416 = vsel %vm400, 1.0, 0.0
    %v417 = vsel %vm401, 1.0, 0.0
    %v418 = vsel %vm402, 1.0, 0.0
    %v419 = vsel %vm403, 1.0, 0.0
    %v420 = vsel %vm404, 1.0, 0.0
    %v421 = vsel %vm405, 1.0, 0.0
    %v422 = vsel %vm406, 1.0, 0.0
    %v423 = vsel %vm407, 1.0, 0.0
    %v424 = vsel %vm408, 1.0, 0.0
    %v425 = vsel %vm409, 1.0, 0.0
    %v426 = vsel %vm410, 1.0, 0.0
    %v427 = vsel %vm411, 1.0, 0.0
    %v428 = vsel %vm412, 1.0, 0.0
    %v429 = vsel %vm413, 1.0, 0.0
    %v430 = vadd.f32 %v334, %v414
    %v431 = vadd.f32 %v335, %v415
    %v432 = vadd.f32 %v336, %v416
    %v433 = vadd.f32 %v337, %v417
    %v434 = vadd.f32 %v338, %v418
    %v435 = vadd.f32 %v339, %v419
    %v436 = vadd.f32 %v340, %v420
    %v437 = vadd.f32 %v341, %v421
    %v438 = vadd.f32 %v342, %v422
    %v439 = vadd.f32 %v343, %v423
    %v440 = vadd.f32 %v344, %v424
    %v441 = vadd.f32 %v345, %v425
    %v442 = vadd.f32 %v346, %v426
    %v443 = vadd.f32 %v347, %v427
    %v444 = vadd.f32 %v348, %v428
    %v445 = vadd.f32 %v349, %v429
    %446 = vset.pattern.permute.xlu0 4
    %447 = vperm.xlu0 %446, %v44
    %v448 = vpop.permute.xlu0 %447
    %449 = vset.pattern.permute.xlu0 4
    %450 = vperm.xlu0 %449, %v45
    %v451 = vpop.permute.xlu0 %450
    %452 = vset.pattern.permute.xlu0 4
    %453 = vperm.xlu0 %452, %v46
    %v454 = vpop.permute.xlu0 %453
    %455 = vset.pattern.permute.xlu0 4
    %456 = vperm.xlu0 %455, %v47
    %v457 = vpop.permute.xlu0 %456
    %458 = vset.pattern.permute.xlu0 4
    %459 = vperm.xlu0 %458, %v48
    %v460 = vpop.permute.xlu0 %459
    %461 = vset.pattern.permute.xlu0 4
    %462 = vperm.xlu0 %461, %v49
    %v463 = vpop.permute.xlu0 %462
    %464 = vset.pattern.permute.xlu0 4
    %465 = vperm.xlu0 %464, %v50
    %v466 = vpop.permute.xlu0 %465
    %467 = vset.pattern.permute.xlu0 4
    %468 = vperm.xlu0 %467, %v51
    %v469 = vpop.permute.xlu0 %468
    %470 = vset.pattern.permute.xlu0 4
    %471 = vperm.xlu0 %470, %v52
    %v472 = vpop.permute.xlu0 %471
    %473 = vset.pattern.permute.xlu0 4
    %474 = vperm.xlu0 %473, %v53
    %v475 = vpop.permute.xlu0 %474
    %476 = vset.pattern.permute.xlu0 4
    %477 = vperm.xlu0 %476, %v54
    %v478 = vpop.permute.xlu0 %477
    %479 = vset.pattern.permute.xlu0 4
    %480 = vperm.xlu0 %479, %v55
    %v481 = vpop.permute.xlu0 %480
    %482 = vset.pattern.permute.xlu0 4
    %483 = vperm.xlu0 %482, %v56
    %v484 = vpop.permute.xlu0 %483
    %485 = vset.pattern.permute.xlu0 4
    %486 = vperm.xlu0 %485, %v57
    %v487 = vpop.permute.xlu0 %486
    %488 = vset.pattern.permute.xlu0 4
    %489 = vperm.xlu0 %488, %v58
    %v490 = vpop.permute.xlu0 %489
    %491 = vset.pattern.permute.xlu0 4
    %492 = vperm.xlu0 %491, %v59
    %v493 = vpop.permute.xlu0 %492
    %vm494 = vcmp.eq.s32.totalorder %v448, %v61
    %vm495 = vcmp.eq.s32.totalorder %v451, %v61
    %vm496 = vcmp.eq.s32.totalorder %v454, %v61
    %vm497 = vcmp.eq.s32.totalorder %v457, %v61
    %vm498 = vcmp.eq.s32.totalorder %v460, %v61
    %vm499 = vcmp.eq.s32.totalorder %v463, %v61
    %vm500 = vcmp.eq.s32.totalorder %v466, %v61
    %vm501 = vcmp.eq.s32.totalorder %v469, %v61
    %vm502 = vcmp.eq.s32.totalorder %v472, %v61
    %vm503 = vcmp.eq.s32.totalorder %v475, %v61
    %vm504 = vcmp.eq.s32.totalorder %v478, %v61
    %vm505 = vcmp.eq.s32.totalorder %v481, %v61
    %vm506 = vcmp.eq.s32.totalorder %v484, %v61
    %vm507 = vcmp.eq.s32.totalorder %v487, %v61
    %vm508 = vcmp.eq.s32.totalorder %v490, %v61
    %vm509 = vcmp.eq.s32.totalorder %v493, %v61
    %v510 = vsel %vm494, 1.0, 0.0
    %v511 = vsel %vm495, 1.0, 0.0
    %v512 = vsel %vm496, 1.0, 0.0
    %v513 = vsel %vm497, 1.0, 0.0
    %v514 = vsel %vm498, 1.0, 0.0
    %v515 = vsel %vm499, 1.0, 0.0
    %v516 = vsel %vm500, 1.0, 0.0
    %v517 = vsel %vm501, 1.0, 0.0
    %v518 = vsel %vm502, 1.0, 0.0
    %v519 = vsel %vm503, 1.0, 0.0
    %v520 = vsel %vm504, 1.0, 0.0
    %v521 = vsel %vm505, 1.0, 0.0
    %v522 = vsel %vm506, 1.0, 0.0
    %v523 = vsel %vm507, 1.0, 0.0
    %v524 = vsel %vm508, 1.0, 0.0
    %v525 = vsel %vm509, 1.0, 0.0
    %v526 = vadd.f32 %v430, %v510
    %v527 = vadd.f32 %v431, %v511
    %v528 = vadd.f32 %v432, %v512
    %v529 = vadd.f32 %v433, %v513
    %v530 = vadd.f32 %v434, %v514
    %v531 = vadd.f32 %v435, %v515
    %v532 = vadd.f32 %v436, %v516
    %v533 = vadd.f32 %v437, %v517
    %v534 = vadd.f32 %v438, %v518
    %v535 = vadd.f32 %v439, %v519
    %v536 = vadd.f32 %v440, %v520
    %v537 = vadd.f32 %v441, %v521
    %v538 = vadd.f32 %v442, %v522
    %v539 = vadd.f32 %v443, %v523
    %v540 = vadd.f32 %v444, %v524
    %v541 = vadd.f32 %v445, %v525
    %542 = vset.pattern.permute.xlu0 5
    %543 = vperm.xlu0 %542, %v44
    %v544 = vpop.permute.xlu0 %543
    %545 = vset.pattern.permute.xlu0 5
    %546 = vperm.xlu0 %545, %v45
    %v547 = vpop.permute.xlu0 %546
    %548 = vset.pattern.permute.xlu0 5
    %549 = vperm.xlu0 %548, %v46
    %v550 = vpop.permute.xlu0 %549
    %551 = vset.pattern.permute.xlu0 5
    %552 = vperm.xlu0 %551, %v47
    %v553 = vpop.permute.xlu0 %552
    %554 = vset.pattern.permute.xlu0 5
    %555 = vperm.xlu0 %554, %v48
    %v556 = vpop.permute.xlu0 %555
    %557 = vset.pattern.permute.xlu0 5
    %558 = vperm.xlu0 %557, %v49
    %v559 = vpop.permute.xlu0 %558
    %560 = vset.pattern.permute.xlu0 5
    %561 = vperm.xlu0 %560, %v50
    %v562 = vpop.permute.xlu0 %561
    %563 = vset.pattern.permute.xlu0 5
    %564 = vperm.xlu0 %563, %v51
    %v565 = vpop.permute.xlu0 %564
    %566 = vset.pattern.permute.xlu0 5
    %567 = vperm.xlu0 %566, %v52
    %v568 = vpop.permute.xlu0 %567
    %569 = vset.pattern.permute.xlu0 5
    %570 = vperm.xlu0 %569, %v53
    %v571 = vpop.permute.xlu0 %570
    %572 = vset.pattern.permute.xlu0 5
    %573 = vperm.xlu0 %572, %v54
    %v574 = vpop.permute.xlu0 %573
    %575 = vset.pattern.permute.xlu0 5
    %576 = vperm.xlu0 %575, %v55
    %v577 = vpop.permute.xlu0 %576
    %578 = vset.pattern.permute.xlu0 5
    %579 = vperm.xlu0 %578, %v56
    %v580 = vpop.permute.xlu0 %579
    %581 = vset.pattern.permute.xlu0 5
    %582 = vperm.xlu0 %581, %v57
    %v583 = vpop.permute.xlu0 %582
    %584 = vset.pattern.permute.xlu0 5
    %585 = vperm.xlu0 %584, %v58
    %v586 = vpop.permute.xlu0 %585
    %587 = vset.pattern.permute.xlu0 5
    %588 = vperm.xlu0 %587, %v59
    %v589 = vpop.permute.xlu0 %588
    %vm590 = vcmp.eq.s32.totalorder %v544, %v61
    %vm591 = vcmp.eq.s32.totalorder %v547, %v61
    %vm592 = vcmp.eq.s32.totalorder %v550, %v61
    %vm593 = vcmp.eq.s32.totalorder %v553, %v61
    %vm594 = vcmp.eq.s32.totalorder %v556, %v61
    %vm595 = vcmp.eq.s32.totalorder %v559, %v61
    %vm596 = vcmp.eq.s32.totalorder %v562, %v61
    %vm597 = vcmp.eq.s32.totalorder %v565, %v61
    %vm598 = vcmp.eq.s32.totalorder %v568, %v61
    %vm599 = vcmp.eq.s32.totalorder %v571, %v61
    %vm600 = vcmp.eq.s32.totalorder %v574, %v61
    %vm601 = vcmp.eq.s32.totalorder %v577, %v61
    %vm602 = vcmp.eq.s32.totalorder %v580, %v61
    %vm603 = vcmp.eq.s32.totalorder %v583, %v61
    %vm604 = vcmp.eq.s32.totalorder %v586, %v61
    %vm605 = vcmp.eq.s32.totalorder %v589, %v61
    %v606 = vsel %vm590, 1.0, 0.0
    %v607 = vsel %vm591, 1.0, 0.0
    %v608 = vsel %vm592, 1.0, 0.0
    %v609 = vsel %vm593, 1.0, 0.0
    %v610 = vsel %vm594, 1.0, 0.0
    %v611 = vsel %vm595, 1.0, 0.0
    %v612 = vsel %vm596, 1.0, 0.0
    %v613 = vsel %vm597, 1.0, 0.0
    %v614 = vsel %vm598, 1.0, 0.0
    %v615 = vsel %vm599, 1.0, 0.0
    %v616 = vsel %vm600, 1.0, 0.0
    %v617 = vsel %vm601, 1.0, 0.0
    %v618 = vsel %vm602, 1.0, 0.0
    %v619 = vsel %vm603, 1.0, 0.0
    %v620 = vsel %vm604, 1.0, 0.0
    %v621 = vsel %vm605, 1.0, 0.0
    %v622 = vadd.f32 %v526, %v606
    %v623 = vadd.f32 %v527, %v607
    %v624 = vadd.f32 %v528, %v608
    %v625 = vadd.f32 %v529, %v609
    %v626 = vadd.f32 %v530, %v610
    %v627 = vadd.f32 %v531, %v611
    %v628 = vadd.f32 %v532, %v612
    %v629 = vadd.f32 %v533, %v613
    %v630 = vadd.f32 %v534, %v614
    %v631 = vadd.f32 %v535, %v615
    %v632 = vadd.f32 %v536, %v616
    %v633 = vadd.f32 %v537, %v617
    %v634 = vadd.f32 %v538, %v618
    %v635 = vadd.f32 %v539, %v619
    %v636 = vadd.f32 %v540, %v620
    %v637 = vadd.f32 %v541, %v621
    %638 = vset.pattern.permute.xlu0 6
    %639 = vperm.xlu0 %638, %v44
    %v640 = vpop.permute.xlu0 %639
    %641 = vset.pattern.permute.xlu0 6
    %642 = vperm.xlu0 %641, %v45
    %v643 = vpop.permute.xlu0 %642
    %644 = vset.pattern.permute.xlu0 6
    %645 = vperm.xlu0 %644, %v46
    %v646 = vpop.permute.xlu0 %645
    %647 = vset.pattern.permute.xlu0 6
    %648 = vperm.xlu0 %647, %v47
    %v649 = vpop.permute.xlu0 %648
    %650 = vset.pattern.permute.xlu0 6
    %651 = vperm.xlu0 %650, %v48
    %v652 = vpop.permute.xlu0 %651
    %653 = vset.pattern.permute.xlu0 6
    %654 = vperm.xlu0 %653, %v49
    %v655 = vpop.permute.xlu0 %654
    %656 = vset.pattern.permute.xlu0 6
    %657 = vperm.xlu0 %656, %v50
    %v658 = vpop.permute.xlu0 %657
    %659 = vset.pattern.permute.xlu0 6
    %660 = vperm.xlu0 %659, %v51
    %v661 = vpop.permute.xlu0 %660
    %662 = vset.pattern.permute.xlu0 6
    %663 = vperm.xlu0 %662, %v52
    %v664 = vpop.permute.xlu0 %663
    %665 = vset.pattern.permute.xlu0 6
    %666 = vperm.xlu0 %665, %v53
    %v667 = vpop.permute.xlu0 %666
    %668 = vset.pattern.permute.xlu0 6
    %669 = vperm.xlu0 %668, %v54
    %v670 = vpop.permute.xlu0 %669
    %671 = vset.pattern.permute.xlu0 6
    %672 = vperm.xlu0 %671, %v55
    %v673 = vpop.permute.xlu0 %672
    %674 = vset.pattern.permute.xlu0 6
    %675 = vperm.xlu0 %674, %v56
    %v676 = vpop.permute.xlu0 %675
    %677 = vset.pattern.permute.xlu0 6
    %678 = vperm.xlu0 %677, %v57
    %v679 = vpop.permute.xlu0 %678
    %680 = vset.pattern.permute.xlu0 6
    %681 = vperm.xlu0 %680, %v58
    %v682 = vpop.permute.xlu0 %681
    %683 = vset.pattern.permute.xlu0 6
    %684 = vperm.xlu0 %683, %v59
    %v685 = vpop.permute.xlu0 %684
    %vm686 = vcmp.eq.s32.totalorder %v640, %v61
    %vm687 = vcmp.eq.s32.totalorder %v643, %v61
    %vm688 = vcmp.eq.s32.totalorder %v646, %v61
    %vm689 = vcmp.eq.s32.totalorder %v649, %v61
    %vm690 = vcmp.eq.s32.totalorder %v652, %v61
    %vm691 = vcmp.eq.s32.totalorder %v655, %v61
    %vm692 = vcmp.eq.s32.totalorder %v658, %v61
    %vm693 = vcmp.eq.s32.totalorder %v661, %v61
    %vm694 = vcmp.eq.s32.totalorder %v664, %v61
    %vm695 = vcmp.eq.s32.totalorder %v667, %v61
    %vm696 = vcmp.eq.s32.totalorder %v670, %v61
    %vm697 = vcmp.eq.s32.totalorder %v673, %v61
    %vm698 = vcmp.eq.s32.totalorder %v676, %v61
    %vm699 = vcmp.eq.s32.totalorder %v679, %v61
    %vm700 = vcmp.eq.s32.totalorder %v682, %v61
    %vm701 = vcmp.eq.s32.totalorder %v685, %v61
    %v702 = vsel %vm686, 1.0, 0.0
    %v703 = vsel %vm687, 1.0, 0.0
    %v704 = vsel %vm688, 1.0, 0.0
    %v705 = vsel %vm689, 1.0, 0.0
    %v706 = vsel %vm690, 1.0, 0.0
    %v707 = vsel %vm691, 1.0, 0.0
    %v708 = vsel %vm692, 1.0, 0.0
    %v709 = vsel %vm693, 1.0, 0.0
    %v710 = vsel %vm694, 1.0, 0.0
    %v711 = vsel %vm695, 1.0, 0.0
    %v712 = vsel %vm696, 1.0, 0.0
    %v713 = vsel %vm697, 1.0, 0.0
    %v714 = vsel %vm698, 1.0, 0.0
    %v715 = vsel %vm699, 1.0, 0.0
    %v716 = vsel %vm700, 1.0, 0.0
    %v717 = vsel %vm701, 1.0, 0.0
    %v718 = vadd.f32 %v622, %v702
    %v719 = vadd.f32 %v623, %v703
    %v720 = vadd.f32 %v624, %v704
    %v721 = vadd.f32 %v625, %v705
    %v722 = vadd.f32 %v626, %v706
    %v723 = vadd.f32 %v627, %v707
    %v724 = vadd.f32 %v628, %v708
    %v725 = vadd.f32 %v629, %v709
    %v726 = vadd.f32 %v630, %v710
    %v727 = vadd.f32 %v631, %v711
    %v728 = vadd.f32 %v632, %v712
    %v729 = vadd.f32 %v633, %v713
    %v730 = vadd.f32 %v634, %v714
    %v731 = vadd.f32 %v635, %v715
    %v732 = vadd.f32 %v636, %v716
    %v733 = vadd.f32 %v637, %v717
    %734 = vset.pattern.permute.xlu0 7
    %735 = vperm.xlu0 %734, %v44
    %v736 = vpop.permute.xlu0 %735
    %737 = vset.pattern.permute.xlu0 7
    %738 = vperm.xlu0 %737, %v45
    %v739 = vpop.permute.xlu0 %738
    %740 = vset.pattern.permute.xlu0 7
    %741 = vperm.xlu0 %740, %v46
    %v742 = vpop.permute.xlu0 %741
    %743 = vset.pattern.permute.xlu0 7
    %744 = vperm.xlu0 %743, %v47
    %v745 = vpop.permute.xlu0 %744
    %746 = vset.pattern.permute.xlu0 7
    %747 = vperm.xlu0 %746, %v48
    %v748 = vpop.permute.xlu0 %747
    %749 = vset.pattern.permute.xlu0 7
    %750 = vperm.xlu0 %749, %v49
    %v751 = vpop.permute.xlu0 %750
    %752 = vset.pattern.permute.xlu0 7
    %753 = vperm.xlu0 %752, %v50
    %v754 = vpop.permute.xlu0 %753
    %755 = vset.pattern.permute.xlu0 7
    %756 = vperm.xlu0 %755, %v51
    %v757 = vpop.permute.xlu0 %756
    %758 = vset.pattern.permute.xlu0 7
    %759 = vperm.xlu0 %758, %v52
    %v760 = vpop.permute.xlu0 %759
    %761 = vset.pattern.permute.xlu0 7
    %762 = vperm.xlu0 %761, %v53
    %v763 = vpop.permute.xlu0 %762
    %764 = vset.pattern.permute.xlu0 7
    %765 = vperm.xlu0 %764, %v54
    %v766 = vpop.permute.xlu0 %765
    %767 = vset.pattern.permute.xlu0 7
    %768 = vperm.xlu0 %767, %v55
    %v769 = vpop.permute.xlu0 %768
    %770 = vset.pattern.permute.xlu0 7
    %771 = vperm.xlu0 %770, %v56
    %v772 = vpop.permute.xlu0 %771
    %773 = vset.pattern.permute.xlu0 7
    %774 = vperm.xlu0 %773, %v57
    %v775 = vpop.permute.xlu0 %774
    %776 = vset.pattern.permute.xlu0 7
    %777 = vperm.xlu0 %776, %v58
    %v778 = vpop.permute.xlu0 %777
    %779 = vset.pattern.permute.xlu0 7
    %780 = vperm.xlu0 %779, %v59
    %v781 = vpop.permute.xlu0 %780
    %vm782 = vcmp.eq.s32.totalorder %v736, %v61
    %vm783 = vcmp.eq.s32.totalorder %v739, %v61
    %vm784 = vcmp.eq.s32.totalorder %v742, %v61
    %vm785 = vcmp.eq.s32.totalorder %v745, %v61
    %vm786 = vcmp.eq.s32.totalorder %v748, %v61
    %vm787 = vcmp.eq.s32.totalorder %v751, %v61
    %vm788 = vcmp.eq.s32.totalorder %v754, %v61
    %vm789 = vcmp.eq.s32.totalorder %v757, %v61
    %vm790 = vcmp.eq.s32.totalorder %v760, %v61
    %vm791 = vcmp.eq.s32.totalorder %v763, %v61
    %vm792 = vcmp.eq.s32.totalorder %v766, %v61
    %vm793 = vcmp.eq.s32.totalorder %v769, %v61
    %vm794 = vcmp.eq.s32.totalorder %v772, %v61
    %vm795 = vcmp.eq.s32.totalorder %v775, %v61
    %vm796 = vcmp.eq.s32.totalorder %v778, %v61
    %vm797 = vcmp.eq.s32.totalorder %v781, %v61
    %v798 = vsel %vm782, 1.0, 0.0
    %v799 = vsel %vm783, 1.0, 0.0
    %v800 = vsel %vm784, 1.0, 0.0
    %v801 = vsel %vm785, 1.0, 0.0
    %v802 = vsel %vm786, 1.0, 0.0
    %v803 = vsel %vm787, 1.0, 0.0
    %v804 = vsel %vm788, 1.0, 0.0
    %v805 = vsel %vm789, 1.0, 0.0
    %v806 = vsel %vm790, 1.0, 0.0
    %v807 = vsel %vm791, 1.0, 0.0
    %v808 = vsel %vm792, 1.0, 0.0
    %v809 = vsel %vm793, 1.0, 0.0
    %v810 = vsel %vm794, 1.0, 0.0
    %v811 = vsel %vm795, 1.0, 0.0
    %v812 = vsel %vm796, 1.0, 0.0
    %v813 = vsel %vm797, 1.0, 0.0
    %v814 = vadd.f32 %v718, %v798
    %v815 = vadd.f32 %v719, %v799
    %v816 = vadd.f32 %v720, %v800
    %v817 = vadd.f32 %v721, %v801
    %v818 = vadd.f32 %v722, %v802
    %v819 = vadd.f32 %v723, %v803
    %v820 = vadd.f32 %v724, %v804
    %v821 = vadd.f32 %v725, %v805
    %v822 = vadd.f32 %v726, %v806
    %v823 = vadd.f32 %v727, %v807
    %v824 = vadd.f32 %v728, %v808
    %v825 = vadd.f32 %v729, %v809
    %v826 = vadd.f32 %v730, %v810
    %v827 = vadd.f32 %v731, %v811
    %v828 = vadd.f32 %v732, %v812
    %v829 = vadd.f32 %v733, %v813
    %830 = vset.pattern.permute.xlu0 8
    %831 = vperm.xlu0 %830, %v44
    %v832 = vpop.permute.xlu0 %831
    %833 = vset.pattern.permute.xlu0 8
    %834 = vperm.xlu0 %833, %v45
    %v835 = vpop.permute.xlu0 %834
    %836 = vset.pattern.permute.xlu0 8
    %837 = vperm.xlu0 %836, %v46
    %v838 = vpop.permute.xlu0 %837
    %839 = vset.pattern.permute.xlu0 8
    %840 = vperm.xlu0 %839, %v47
    %v841 = vpop.permute.xlu0 %840
    %842 = vset.pattern.permute.xlu0 8
    %843 = vperm.xlu0 %842, %v48
    %v844 = vpop.permute.xlu0 %843
    %845 = vset.pattern.permute.xlu0 8
    %846 = vperm.xlu0 %845, %v49
    %v847 = vpop.permute.xlu0 %846
    %848 = vset.pattern.permute.xlu0 8
    %849 = vperm.xlu0 %848, %v50
    %v850 = vpop.permute.xlu0 %849
    %851 = vset.pattern.permute.xlu0 8
    %852 = vperm.xlu0 %851, %v51
    %v853 = vpop.permute.xlu0 %852
    %854 = vset.pattern.permute.xlu0 8
    %855 = vperm.xlu0 %854, %v52
    %v856 = vpop.permute.xlu0 %855
    %857 = vset.pattern.permute.xlu0 8
    %858 = vperm.xlu0 %857, %v53
    %v859 = vpop.permute.xlu0 %858
    %860 = vset.pattern.permute.xlu0 8
    %861 = vperm.xlu0 %860, %v54
    %v862 = vpop.permute.xlu0 %861
    %863 = vset.pattern.permute.xlu0 8
    %864 = vperm.xlu0 %863, %v55
    %v865 = vpop.permute.xlu0 %864
    %866 = vset.pattern.permute.xlu0 8
    %867 = vperm.xlu0 %866, %v56
    %v868 = vpop.permute.xlu0 %867
    %869 = vset.pattern.permute.xlu0 8
    %870 = vperm.xlu0 %869, %v57
    %v871 = vpop.permute.xlu0 %870
    %872 = vset.pattern.permute.xlu0 8
    %873 = vperm.xlu0 %872, %v58
    %v874 = vpop.permute.xlu0 %873
    %875 = vset.pattern.permute.xlu0 8
    %876 = vperm.xlu0 %875, %v59
    %v877 = vpop.permute.xlu0 %876
    %vm878 = vcmp.eq.s32.totalorder %v832, %v61
    %vm879 = vcmp.eq.s32.totalorder %v835, %v61
    %vm880 = vcmp.eq.s32.totalorder %v838, %v61
    %vm881 = vcmp.eq.s32.totalorder %v841, %v61
    %vm882 = vcmp.eq.s32.totalorder %v844, %v61
    %vm883 = vcmp.eq.s32.totalorder %v847, %v61
    %vm884 = vcmp.eq.s32.totalorder %v850, %v61
    %vm885 = vcmp.eq.s32.totalorder %v853, %v61
    %vm886 = vcmp.eq.s32.totalorder %v856, %v61
    %vm887 = vcmp.eq.s32.totalorder %v859, %v61
    %vm888 = vcmp.eq.s32.totalorder %v862, %v61
    %vm889 = vcmp.eq.s32.totalorder %v865, %v61
    %vm890 = vcmp.eq.s32.totalorder %v868, %v61
    %vm891 = vcmp.eq.s32.totalorder %v871, %v61
    %vm892 = vcmp.eq.s32.totalorder %v874, %v61
    %vm893 = vcmp.eq.s32.totalorder %v877, %v61
    %v894 = vsel %vm878, 1.0, 0.0
    %v895 = vsel %vm879, 1.0, 0.0
    %v896 = vsel %vm880, 1.0, 0.0
    %v897 = vsel %vm881, 1.0, 0.0
    %v898 = vsel %vm882, 1.0, 0.0
    %v899 = vsel %vm883, 1.0, 0.0
    %v900 = vsel %vm884, 1.0, 0.0
    %v901 = vsel %vm885, 1.0, 0.0
    %v902 = vsel %vm886, 1.0, 0.0
    %v903 = vsel %vm887, 1.0, 0.0
    %v904 = vsel %vm888, 1.0, 0.0
    %v905 = vsel %vm889, 1.0, 0.0
    %v906 = vsel %vm890, 1.0, 0.0
    %v907 = vsel %vm891, 1.0, 0.0
    %v908 = vsel %vm892, 1.0, 0.0
    %v909 = vsel %vm893, 1.0, 0.0
    %v910 = vadd.f32 %v814, %v894
    %v911 = vadd.f32 %v815, %v895
    %v912 = vadd.f32 %v816, %v896
    %v913 = vadd.f32 %v817, %v897
    %v914 = vadd.f32 %v818, %v898
    %v915 = vadd.f32 %v819, %v899
    %v916 = vadd.f32 %v820, %v900
    %v917 = vadd.f32 %v821, %v901
    %v918 = vadd.f32 %v822, %v902
    %v919 = vadd.f32 %v823, %v903
    %v920 = vadd.f32 %v824, %v904
    %v921 = vadd.f32 %v825, %v905
    %v922 = vadd.f32 %v826, %v906
    %v923 = vadd.f32 %v827, %v907
    %v924 = vadd.f32 %v828, %v908
    %v925 = vadd.f32 %v829, %v909
    %926 = vset.pattern.permute.xlu0 9
    %927 = vperm.xlu0 %926, %v44
    %v928 = vpop.permute.xlu0 %927
    %929 = vset.pattern.permute.xlu0 9
    %930 = vperm.xlu0 %929, %v45
    %v931 = vpop.permute.xlu0 %930
    %932 = vset.pattern.permute.xlu0 9
    %933 = vperm.xlu0 %932, %v46
    %v934 = vpop.permute.xlu0 %933
    %935 = vset.pattern.permute.xlu0 9
    %936 = vperm.xlu0 %935, %v47
    %v937 = vpop.permute.xlu0 %936
    %938 = vset.pattern.permute.xlu0 9
    %939 = vperm.xlu0 %938, %v48
    %v940 = vpop.permute.xlu0 %939
    %941 = vset.pattern.permute.xlu0 9
    %942 = vperm.xlu0 %941, %v49
    %v943 = vpop.permute.xlu0 %942
    %944 = vset.pattern.permute.xlu0 9
    %945 = vperm.xlu0 %944, %v50
    %v946 = vpop.permute.xlu0 %945
    %947 = vset.pattern.permute.xlu0 9
    %948 = vperm.xlu0 %947, %v51
    %v949 = vpop.permute.xlu0 %948
    %950 = vset.pattern.permute.xlu0 9
    %951 = vperm.xlu0 %950, %v52
    %v952 = vpop.permute.xlu0 %951
    %953 = vset.pattern.permute.xlu0 9
    %954 = vperm.xlu0 %953, %v53
    %v955 = vpop.permute.xlu0 %954
    %956 = vset.pattern.permute.xlu0 9
    %957 = vperm.xlu0 %956, %v54
    %v958 = vpop.permute.xlu0 %957
    %959 = vset.pattern.permute.xlu0 9
    %960 = vperm.xlu0 %959, %v55
    %v961 = vpop.permute.xlu0 %960
    %962 = vset.pattern.permute.xlu0 9
    %963 = vperm.xlu0 %962, %v56
    %v964 = vpop.permute.xlu0 %963
    %965 = vset.pattern.permute.xlu0 9
    %966 = vperm.xlu0 %965, %v57
    %v967 = vpop.permute.xlu0 %966
    %968 = vset.pattern.permute.xlu0 9
    %969 = vperm.xlu0 %968, %v58
    %v970 = vpop.permute.xlu0 %969
    %971 = vset.pattern.permute.xlu0 9
    %972 = vperm.xlu0 %971, %v59
    %v973 = vpop.permute.xlu0 %972
    %vm974 = vcmp.eq.s32.totalorder %v928, %v61
    %vm975 = vcmp.eq.s32.totalorder %v931, %v61
    %vm976 = vcmp.eq.s32.totalorder %v934, %v61
    %vm977 = vcmp.eq.s32.totalorder %v937, %v61
    %vm978 = vcmp.eq.s32.totalorder %v940, %v61
    %vm979 = vcmp.eq.s32.totalorder %v943, %v61
    %vm980 = vcmp.eq.s32.totalorder %v946, %v61
    %vm981 = vcmp.eq.s32.totalorder %v949, %v61
    %vm982 = vcmp.eq.s32.totalorder %v952, %v61
    %vm983 = vcmp.eq.s32.totalorder %v955, %v61
    %vm984 = vcmp.eq.s32.totalorder %v958, %v61
    %vm985 = vcmp.eq.s32.totalorder %v961, %v61
    %vm986 = vcmp.eq.s32.totalorder %v964, %v61
    %vm987 = vcmp.eq.s32.totalorder %v967, %v61
    %vm988 = vcmp.eq.s32.totalorder %v970, %v61
    %vm989 = vcmp.eq.s32.totalorder %v973, %v61
    %v990 = vsel %vm974, 1.0, 0.0
    %v991 = vsel %vm975, 1.0, 0.0
    %v992 = vsel %vm976, 1.0, 0.0
    %v993 = vsel %vm977, 1.0, 0.0
    %v994 = vsel %vm978, 1.0, 0.0
    %v995 = vsel %vm979, 1.0, 0.0
    %v996 = vsel %vm980, 1.0, 0.0
    %v997 = vsel %vm981, 1.0, 0.0
    %v998 = vsel %vm982, 1.0, 0.0
    %v999 = vsel %vm983, 1.0, 0.0
    %v1000 = vsel %vm984, 1.0, 0.0
    %v1001 = vsel %vm985, 1.0, 0.0
    %v1002 = vsel %vm986, 1.0, 0.0
    %v1003 = vsel %vm987, 1.0, 0.0
    %v1004 = vsel %vm988, 1.0, 0.0
    %v1005 = vsel %vm989, 1.0, 0.0
    %v1006 = vadd.f32 %v910, %v990
    %v1007 = vadd.f32 %v911, %v991
    %v1008 = vadd.f32 %v912, %v992
    %v1009 = vadd.f32 %v913, %v993
    %v1010 = vadd.f32 %v914, %v994
    %v1011 = vadd.f32 %v915, %v995
    %v1012 = vadd.f32 %v916, %v996
    %v1013 = vadd.f32 %v917, %v997
    %v1014 = vadd.f32 %v918, %v998
    %v1015 = vadd.f32 %v919, %v999
    %v1016 = vadd.f32 %v920, %v1000
    %v1017 = vadd.f32 %v921, %v1001
    %v1018 = vadd.f32 %v922, %v1002
    %v1019 = vadd.f32 %v923, %v1003
    %v1020 = vadd.f32 %v924, %v1004
    %v1021 = vadd.f32 %v925, %v1005
    %1022 = vset.pattern.permute.xlu0 10
    %1023 = vperm.xlu0 %1022, %v44
    %v1024 = vpop.permute.xlu0 %1023
    %1025 = vset.pattern.permute.xlu0 10
    %1026 = vperm.xlu0 %1025, %v45
    %v1027 = vpop.permute.xlu0 %1026
    %1028 = vset.pattern.permute.xlu0 10
    %1029 = vperm.xlu0 %1028, %v46
    %v1030 = vpop.permute.xlu0 %1029
    %1031 = vset.pattern.permute.xlu0 10
    %1032 = vperm.xlu0 %1031, %v47
    %v1033 = vpop.permute.xlu0 %1032
    %1034 = vset.pattern.permute.xlu0 10
    %1035 = vperm.xlu0 %1034, %v48
    %v1036 = vpop.permute.xlu0 %1035
    %1037 = vset.pattern.permute.xlu0 10
    %1038 = vperm.xlu0 %1037, %v49
    %v1039 = vpop.permute.xlu0 %1038
    %1040 = vset.pattern.permute.xlu0 10
    %1041 = vperm.xlu0 %1040, %v50
    %v1042 = vpop.permute.xlu0 %1041
    %1043 = vset.pattern.permute.xlu0 10
    %1044 = vperm.xlu0 %1043, %v51
    %v1045 = vpop.permute.xlu0 %1044
    %1046 = vset.pattern.permute.xlu0 10
    %1047 = vperm.xlu0 %1046, %v52
    %v1048 = vpop.permute.xlu0 %1047
    %1049 = vset.pattern.permute.xlu0 10
    %1050 = vperm.xlu0 %1049, %v53
    %v1051 = vpop.permute.xlu0 %1050
    %1052 = vset.pattern.permute.xlu0 10
    %1053 = vperm.xlu0 %1052, %v54
    %v1054 = vpop.permute.xlu0 %1053
    %1055 = vset.pattern.permute.xlu0 10
    %1056 = vperm.xlu0 %1055, %v55
    %v1057 = vpop.permute.xlu0 %1056
    %1058 = vset.pattern.permute.xlu0 10
    %1059 = vperm.xlu0 %1058, %v56
    %v1060 = vpop.permute.xlu0 %1059
    %1061 = vset.pattern.permute.xlu0 10
    %1062 = vperm.xlu0 %1061, %v57
    %v1063 = vpop.permute.xlu0 %1062
    %1064 = vset.pattern.permute.xlu0 10
    %1065 = vperm.xlu0 %1064, %v58
    %v1066 = vpop.permute.xlu0 %1065
    %1067 = vset.pattern.permute.xlu0 10
    %1068 = vperm.xlu0 %1067, %v59
    %v1069 = vpop.permute.xlu0 %1068
    %vm1070 = vcmp.eq.s32.totalorder %v1024, %v61
    %vm1071 = vcmp.eq.s32.totalorder %v1027, %v61
    %vm1072 = vcmp.eq.s32.totalorder %v1030, %v61
    %vm1073 = vcmp.eq.s32.totalorder %v1033, %v61
    %vm1074 = vcmp.eq.s32.totalorder %v1036, %v61
    %vm1075 = vcmp.eq.s32.totalorder %v1039, %v61
    %vm1076 = vcmp.eq.s32.totalorder %v1042, %v61
    %vm1077 = vcmp.eq.s32.totalorder %v1045, %v61
    %vm1078 = vcmp.eq.s32.totalorder %v1048, %v61
    %vm1079 = vcmp.eq.s32.totalorder %v1051, %v61
    %vm1080 = vcmp.eq.s32.totalorder %v1054, %v61
    %vm1081 = vcmp.eq.s32.totalorder %v1057, %v61
    %vm1082 = vcmp.eq.s32.totalorder %v1060, %v61
    %vm1083 = vcmp.eq.s32.totalorder %v1063, %v61
    %vm1084 = vcmp.eq.s32.totalorder %v1066, %v61
    %vm1085 = vcmp.eq.s32.totalorder %v1069, %v61
    %v1086 = vsel %vm1070, 1.0, 0.0
    %v1087 = vsel %vm1071, 1.0, 0.0
    %v1088 = vsel %vm1072, 1.0, 0.0
    %v1089 = vsel %vm1073, 1.0, 0.0
    %v1090 = vsel %vm1074, 1.0, 0.0
    %v1091 = vsel %vm1075, 1.0, 0.0
    %v1092 = vsel %vm1076, 1.0, 0.0
    %v1093 = vsel %vm1077, 1.0, 0.0
    %v1094 = vsel %vm1078, 1.0, 0.0
    %v1095 = vsel %vm1079, 1.0, 0.0
    %v1096 = vsel %vm1080, 1.0, 0.0
    %v1097 = vsel %vm1081, 1.0, 0.0
    %v1098 = vsel %vm1082, 1.0, 0.0
    %v1099 = vsel %vm1083, 1.0, 0.0
    %v1100 = vsel %vm1084, 1.0, 0.0
    %v1101 = vsel %vm1085, 1.0, 0.0
    %v1102 = vadd.f32 %v1006, %v1086
    %v1103 = vadd.f32 %v1007, %v1087
    %v1104 = vadd.f32 %v1008, %v1088
    %v1105 = vadd.f32 %v1009, %v1089
    %v1106 = vadd.f32 %v1010, %v1090
    %v1107 = vadd.f32 %v1011, %v1091
    %v1108 = vadd.f32 %v1012, %v1092
    %v1109 = vadd.f32 %v1013, %v1093
    %v1110 = vadd.f32 %v1014, %v1094
    %v1111 = vadd.f32 %v1015, %v1095
    %v1112 = vadd.f32 %v1016, %v1096
    %v1113 = vadd.f32 %v1017, %v1097
    %v1114 = vadd.f32 %v1018, %v1098
    %v1115 = vadd.f32 %v1019, %v1099
    %v1116 = vadd.f32 %v1020, %v1100
    %v1117 = vadd.f32 %v1021, %v1101
    %1118 = vset.pattern.permute.xlu0 11
    %1119 = vperm.xlu0 %1118, %v44
    %v1120 = vpop.permute.xlu0 %1119
    %1121 = vset.pattern.permute.xlu0 11
    %1122 = vperm.xlu0 %1121, %v45
    %v1123 = vpop.permute.xlu0 %1122
    %1124 = vset.pattern.permute.xlu0 11
    %1125 = vperm.xlu0 %1124, %v46
    %v1126 = vpop.permute.xlu0 %1125
    %1127 = vset.pattern.permute.xlu0 11
    %1128 = vperm.xlu0 %1127, %v47
    %v1129 = vpop.permute.xlu0 %1128
    %1130 = vset.pattern.permute.xlu0 11
    %1131 = vperm.xlu0 %1130, %v48
    %v1132 = vpop.permute.xlu0 %1131
    %1133 = vset.pattern.permute.xlu0 11
    %1134 = vperm.xlu0 %1133, %v49
    %v1135 = vpop.permute.xlu0 %1134
    %1136 = vset.pattern.permute.xlu0 11
    %1137 = vperm.xlu0 %1136, %v50
    %v1138 = vpop.permute.xlu0 %1137
    %1139 = vset.pattern.permute.xlu0 11
    %1140 = vperm.xlu0 %1139, %v51
    %v1141 = vpop.permute.xlu0 %1140
    %1142 = vset.pattern.permute.xlu0 11
    %1143 = vperm.xlu0 %1142, %v52
    %v1144 = vpop.permute.xlu0 %1143
    %1145 = vset.pattern.permute.xlu0 11
    %1146 = vperm.xlu0 %1145, %v53
    %v1147 = vpop.permute.xlu0 %1146
    %1148 = vset.pattern.permute.xlu0 11
    %1149 = vperm.xlu0 %1148, %v54
    %v1150 = vpop.permute.xlu0 %1149
    %1151 = vset.pattern.permute.xlu0 11
    %1152 = vperm.xlu0 %1151, %v55
    %v1153 = vpop.permute.xlu0 %1152
    %1154 = vset.pattern.permute.xlu0 11
    %1155 = vperm.xlu0 %1154, %v56
    %v1156 = vpop.permute.xlu0 %1155
    %1157 = vset.pattern.permute.xlu0 11
    %1158 = vperm.xlu0 %1157, %v57
    %v1159 = vpop.permute.xlu0 %1158
    %1160 = vset.pattern.permute.xlu0 11
    %1161 = vperm.xlu0 %1160, %v58
    %v1162 = vpop.permute.xlu0 %1161
    %1163 = vset.pattern.permute.xlu0 11
    %1164 = vperm.xlu0 %1163, %v59
    %v1165 = vpop.permute.xlu0 %1164
    %vm1166 = vcmp.eq.s32.totalorder %v1120, %v61
    %vm1167 = vcmp.eq.s32.totalorder %v1123, %v61
    %vm1168 = vcmp.eq.s32.totalorder %v1126, %v61
    %vm1169 = vcmp.eq.s32.totalorder %v1129, %v61
    %vm1170 = vcmp.eq.s32.totalorder %v1132, %v61
    %vm1171 = vcmp.eq.s32.totalorder %v1135, %v61
    %vm1172 = vcmp.eq.s32.totalorder %v1138, %v61
    %vm1173 = vcmp.eq.s32.totalorder %v1141, %v61
    %vm1174 = vcmp.eq.s32.totalorder %v1144, %v61
    %vm1175 = vcmp.eq.s32.totalorder %v1147, %v61
    %vm1176 = vcmp.eq.s32.totalorder %v1150, %v61
    %vm1177 = vcmp.eq.s32.totalorder %v1153, %v61
    %vm1178 = vcmp.eq.s32.totalorder %v1156, %v61
    %vm1179 = vcmp.eq.s32.totalorder %v1159, %v61
    %vm1180 = vcmp.eq.s32.totalorder %v1162, %v61
    %vm1181 = vcmp.eq.s32.totalorder %v1165, %v61
    %v1182 = vsel %vm1166, 1.0, 0.0
    %v1183 = vsel %vm1167, 1.0, 0.0
    %v1184 = vsel %vm1168, 1.0, 0.0
    %v1185 = vsel %vm1169, 1.0, 0.0
    %v1186 = vsel %vm1170, 1.0, 0.0
    %v1187 = vsel %vm1171, 1.0, 0.0
    %v1188 = vsel %vm1172, 1.0, 0.0
    %v1189 = vsel %vm1173, 1.0, 0.0
    %v1190 = vsel %vm1174, 1.0, 0.0
    %v1191 = vsel %vm1175, 1.0, 0.0
    %v1192 = vsel %vm1176, 1.0, 0.0
    %v1193 = vsel %vm1177, 1.0, 0.0
    %v1194 = vsel %vm1178, 1.0, 0.0
    %v1195 = vsel %vm1179, 1.0, 0.0
    %v1196 = vsel %vm1180, 1.0, 0.0
    %v1197 = vsel %vm1181, 1.0, 0.0
    %v1198 = vadd.f32 %v1102, %v1182
    %v1199 = vadd.f32 %v1103, %v1183
    %v1200 = vadd.f32 %v1104, %v1184
    %v1201 = vadd.f32 %v1105, %v1185
    %v1202 = vadd.f32 %v1106, %v1186
    %v1203 = vadd.f32 %v1107, %v1187
    %v1204 = vadd.f32 %v1108, %v1188
    %v1205 = vadd.f32 %v1109, %v1189
    %v1206 = vadd.f32 %v1110, %v1190
    %v1207 = vadd.f32 %v1111, %v1191
    %v1208 = vadd.f32 %v1112, %v1192
    %v1209 = vadd.f32 %v1113, %v1193
    %v1210 = vadd.f32 %v1114, %v1194
    %v1211 = vadd.f32 %v1115, %v1195
    %v1212 = vadd.f32 %v1116, %v1196
    %v1213 = vadd.f32 %v1117, %v1197
    %1214 = vset.pattern.permute.xlu0 12
    %1215 = vperm.xlu0 %1214, %v44
    %v1216 = vpop.permute.xlu0 %1215
    %1217 = vset.pattern.permute.xlu0 12
    %1218 = vperm.xlu0 %1217, %v45
    %v1219 = vpop.permute.xlu0 %1218
    %1220 = vset.pattern.permute.xlu0 12
    %1221 = vperm.xlu0 %1220, %v46
    %v1222 = vpop.permute.xlu0 %1221
    %1223 = vset.pattern.permute.xlu0 12
    %1224 = vperm.xlu0 %1223, %v47
    %v1225 = vpop.permute.xlu0 %1224
    %1226 = vset.pattern.permute.xlu0 12
    %1227 = vperm.xlu0 %1226, %v48
    %v1228 = vpop.permute.xlu0 %1227
    %1229 = vset.pattern.permute.xlu0 12
    %1230 = vperm.xlu0 %1229, %v49
    %v1231 = vpop.permute.xlu0 %1230
    %1232 = vset.pattern.permute.xlu0 12
    %1233 = vperm.xlu0 %1232, %v50
    %v1234 = vpop.permute.xlu0 %1233
    %1235 = vset.pattern.permute.xlu0 12
    %1236 = vperm.xlu0 %1235, %v51
    %v1237 = vpop.permute.xlu0 %1236
    %1238 = vset.pattern.permute.xlu0 12
    %1239 = vperm.xlu0 %1238, %v52
    %v1240 = vpop.permute.xlu0 %1239
    %1241 = vset.pattern.permute.xlu0 12
    %1242 = vperm.xlu0 %1241, %v53
    %v1243 = vpop.permute.xlu0 %1242
    %1244 = vset.pattern.permute.xlu0 12
    %1245 = vperm.xlu0 %1244, %v54
    %v1246 = vpop.permute.xlu0 %1245
    %1247 = vset.pattern.permute.xlu0 12
    %1248 = vperm.xlu0 %1247, %v55
    %v1249 = vpop.permute.xlu0 %1248
    %1250 = vset.pattern.permute.xlu0 12
    %1251 = vperm.xlu0 %1250, %v56
    %v1252 = vpop.permute.xlu0 %1251
    %1253 = vset.pattern.permute.xlu0 12
    %1254 = vperm.xlu0 %1253, %v57
    %v1255 = vpop.permute.xlu0 %1254
    %1256 = vset.pattern.permute.xlu0 12
    %1257 = vperm.xlu0 %1256, %v58
    %v1258 = vpop.permute.xlu0 %1257
    %1259 = vset.pattern.permute.xlu0 12
    %1260 = vperm.xlu0 %1259, %v59
    %v1261 = vpop.permute.xlu0 %1260
    %vm1262 = vcmp.eq.s32.totalorder %v1216, %v61
    %vm1263 = vcmp.eq.s32.totalorder %v1219, %v61
    %vm1264 = vcmp.eq.s32.totalorder %v1222, %v61
    %vm1265 = vcmp.eq.s32.totalorder %v1225, %v61
    %vm1266 = vcmp.eq.s32.totalorder %v1228, %v61
    %vm1267 = vcmp.eq.s32.totalorder %v1231, %v61
    %vm1268 = vcmp.eq.s32.totalorder %v1234, %v61
    %vm1269 = vcmp.eq.s32.totalorder %v1237, %v61
    %vm1270 = vcmp.eq.s32.totalorder %v1240, %v61
    %vm1271 = vcmp.eq.s32.totalorder %v1243, %v61
    %vm1272 = vcmp.eq.s32.totalorder %v1246, %v61
    %vm1273 = vcmp.eq.s32.totalorder %v1249, %v61
    %vm1274 = vcmp.eq.s32.totalorder %v1252, %v61
    %vm1275 = vcmp.eq.s32.totalorder %v1255, %v61
    %vm1276 = vcmp.eq.s32.totalorder %v1258, %v61
    %vm1277 = vcmp.eq.s32.totalorder %v1261, %v61
    %v1278 = vsel %vm1262, 1.0, 0.0
    %v1279 = vsel %vm1263, 1.0, 0.0
    %v1280 = vsel %vm1264, 1.0, 0.0
    %v1281 = vsel %vm1265, 1.0, 0.0
    %v1282 = vsel %vm1266, 1.0, 0.0
    %v1283 = vsel %vm1267, 1.0, 0.0
    %v1284 = vsel %vm1268, 1.0, 0.0
    %v1285 = vsel %vm1269, 1.0, 0.0
    %v1286 = vsel %vm1270, 1.0, 0.0
    %v1287 = vsel %vm1271, 1.0, 0.0
    %v1288 = vsel %vm1272, 1.0, 0.0
    %v1289 = vsel %vm1273, 1.0, 0.0
    %v1290 = vsel %vm1274, 1.0, 0.0
    %v1291 = vsel %vm1275, 1.0, 0.0
    %v1292 = vsel %vm1276, 1.0, 0.0
    %v1293 = vsel %vm1277, 1.0, 0.0
    %v1294 = vadd.f32 %v1198, %v1278
    %v1295 = vadd.f32 %v1199, %v1279
    %v1296 = vadd.f32 %v1200, %v1280
    %v1297 = vadd.f32 %v1201, %v1281
    %v1298 = vadd.f32 %v1202, %v1282
    %v1299 = vadd.f32 %v1203, %v1283
    %v1300 = vadd.f32 %v1204, %v1284
    %v1301 = vadd.f32 %v1205, %v1285
    %v1302 = vadd.f32 %v1206, %v1286
    %v1303 = vadd.f32 %v1207, %v1287
    %v1304 = vadd.f32 %v1208, %v1288
    %v1305 = vadd.f32 %v1209, %v1289
    %v1306 = vadd.f32 %v1210, %v1290
    %v1307 = vadd.f32 %v1211, %v1291
    %v1308 = vadd.f32 %v1212, %v1292
    %v1309 = vadd.f32 %v1213, %v1293
    %1310 = vset.pattern.permute.xlu0 13
    %1311 = vperm.xlu0 %1310, %v44
    %v1312 = vpop.permute.xlu0 %1311
    %1313 = vset.pattern.permute.xlu0 13
    %1314 = vperm.xlu0 %1313, %v45
    %v1315 = vpop.permute.xlu0 %1314
    %1316 = vset.pattern.permute.xlu0 13
    %1317 = vperm.xlu0 %1316, %v46
    %v1318 = vpop.permute.xlu0 %1317
    %1319 = vset.pattern.permute.xlu0 13
    %1320 = vperm.xlu0 %1319, %v47
    %v1321 = vpop.permute.xlu0 %1320
    %1322 = vset.pattern.permute.xlu0 13
    %1323 = vperm.xlu0 %1322, %v48
    %v1324 = vpop.permute.xlu0 %1323
    %1325 = vset.pattern.permute.xlu0 13
    %1326 = vperm.xlu0 %1325, %v49
    %v1327 = vpop.permute.xlu0 %1326
    %1328 = vset.pattern.permute.xlu0 13
    %1329 = vperm.xlu0 %1328, %v50
    %v1330 = vpop.permute.xlu0 %1329
    %1331 = vset.pattern.permute.xlu0 13
    %1332 = vperm.xlu0 %1331, %v51
    %v1333 = vpop.permute.xlu0 %1332
    %1334 = vset.pattern.permute.xlu0 13
    %1335 = vperm.xlu0 %1334, %v52
    %v1336 = vpop.permute.xlu0 %1335
    %1337 = vset.pattern.permute.xlu0 13
    %1338 = vperm.xlu0 %1337, %v53
    %v1339 = vpop.permute.xlu0 %1338
    %1340 = vset.pattern.permute.xlu0 13
    %1341 = vperm.xlu0 %1340, %v54
    %v1342 = vpop.permute.xlu0 %1341
    %1343 = vset.pattern.permute.xlu0 13
    %1344 = vperm.xlu0 %1343, %v55
    %v1345 = vpop.permute.xlu0 %1344
    %1346 = vset.pattern.permute.xlu0 13
    %1347 = vperm.xlu0 %1346, %v56
    %v1348 = vpop.permute.xlu0 %1347
    %1349 = vset.pattern.permute.xlu0 13
    %1350 = vperm.xlu0 %1349, %v57
    %v1351 = vpop.permute.xlu0 %1350
    %1352 = vset.pattern.permute.xlu0 13
    %1353 = vperm.xlu0 %1352, %v58
    %v1354 = vpop.permute.xlu0 %1353
    %1355 = vset.pattern.permute.xlu0 13
    %1356 = vperm.xlu0 %1355, %v59
    %v1357 = vpop.permute.xlu0 %1356
    %vm1358 = vcmp.eq.s32.totalorder %v1312, %v61
    %vm1359 = vcmp.eq.s32.totalorder %v1315, %v61
    %vm1360 = vcmp.eq.s32.totalorder %v1318, %v61
    %vm1361 = vcmp.eq.s32.totalorder %v1321, %v61
    %vm1362 = vcmp.eq.s32.totalorder %v1324, %v61
    %vm1363 = vcmp.eq.s32.totalorder %v1327, %v61
    %vm1364 = vcmp.eq.s32.totalorder %v1330, %v61
    %vm1365 = vcmp.eq.s32.totalorder %v1333, %v61
    %vm1366 = vcmp.eq.s32.totalorder %v1336, %v61
    %vm1367 = vcmp.eq.s32.totalorder %v1339, %v61
    %vm1368 = vcmp.eq.s32.totalorder %v1342, %v61
    %vm1369 = vcmp.eq.s32.totalorder %v1345, %v61
    %vm1370 = vcmp.eq.s32.totalorder %v1348, %v61
    %vm1371 = vcmp.eq.s32.totalorder %v1351, %v61
    %vm1372 = vcmp.eq.s32.totalorder %v1354, %v61
    %vm1373 = vcmp.eq.s32.totalorder %v1357, %v61
    %v1374 = vsel %vm1358, 1.0, 0.0
    %v1375 = vsel %vm1359, 1.0, 0.0
    %v1376 = vsel %vm1360, 1.0, 0.0
    %v1377 = vsel %vm1361, 1.0, 0.0
    %v1378 = vsel %vm1362, 1.0, 0.0
    %v1379 = vsel %vm1363, 1.0, 0.0
    %v1380 = vsel %vm1364, 1.0, 0.0
    %v1381 = vsel %vm1365, 1.0, 0.0
    %v1382 = vsel %vm1366, 1.0, 0.0
    %v1383 = vsel %vm1367, 1.0, 0.0
    %v1384 = vsel %vm1368, 1.0, 0.0
    %v1385 = vsel %vm1369, 1.0, 0.0
    %v1386 = vsel %vm1370, 1.0, 0.0
    %v1387 = vsel %vm1371, 1.0, 0.0
    %v1388 = vsel %vm1372, 1.0, 0.0
    %v1389 = vsel %vm1373, 1.0, 0.0
    %v1390 = vadd.f32 %v1294, %v1374
    %v1391 = vadd.f32 %v1295, %v1375
    %v1392 = vadd.f32 %v1296, %v1376
    %v1393 = vadd.f32 %v1297, %v1377
    %v1394 = vadd.f32 %v1298, %v1378
    %v1395 = vadd.f32 %v1299, %v1379
    %v1396 = vadd.f32 %v1300, %v1380
    %v1397 = vadd.f32 %v1301, %v1381
    %v1398 = vadd.f32 %v1302, %v1382
    %v1399 = vadd.f32 %v1303, %v1383
    %v1400 = vadd.f32 %v1304, %v1384
    %v1401 = vadd.f32 %v1305, %v1385
    %v1402 = vadd.f32 %v1306, %v1386
    %v1403 = vadd.f32 %v1307, %v1387
    %v1404 = vadd.f32 %v1308, %v1388
    %v1405 = vadd.f32 %v1309, %v1389
    %1406 = vset.pattern.permute.xlu0 14
    %1407 = vperm.xlu0 %1406, %v44
    %v1408 = vpop.permute.xlu0 %1407
    %1409 = vset.pattern.permute.xlu0 14
    %1410 = vperm.xlu0 %1409, %v45
    %v1411 = vpop.permute.xlu0 %1410
    %1412 = vset.pattern.permute.xlu0 14
    %1413 = vperm.xlu0 %1412, %v46
    %v1414 = vpop.permute.xlu0 %1413
    %1415 = vset.pattern.permute.xlu0 14
    %1416 = vperm.xlu0 %1415, %v47
    %v1417 = vpop.permute.xlu0 %1416
    %1418 = vset.pattern.permute.xlu0 14
    %1419 = vperm.xlu0 %1418, %v48
    %v1420 = vpop.permute.xlu0 %1419
    %1421 = vset.pattern.permute.xlu0 14
    %1422 = vperm.xlu0 %1421, %v49
    %v1423 = vpop.permute.xlu0 %1422
    %1424 = vset.pattern.permute.xlu0 14
    %1425 = vperm.xlu0 %1424, %v50
    %v1426 = vpop.permute.xlu0 %1425
    %1427 = vset.pattern.permute.xlu0 14
    %1428 = vperm.xlu0 %1427, %v51
    %v1429 = vpop.permute.xlu0 %1428
    %1430 = vset.pattern.permute.xlu0 14
    %1431 = vperm.xlu0 %1430, %v52
    %v1432 = vpop.permute.xlu0 %1431
    %1433 = vset.pattern.permute.xlu0 14
    %1434 = vperm.xlu0 %1433, %v53
    %v1435 = vpop.permute.xlu0 %1434
    %1436 = vset.pattern.permute.xlu0 14
    %1437 = vperm.xlu0 %1436, %v54
    %v1438 = vpop.permute.xlu0 %1437
    %1439 = vset.pattern.permute.xlu0 14
    %1440 = vperm.xlu0 %1439, %v55
    %v1441 = vpop.permute.xlu0 %1440
    %1442 = vset.pattern.permute.xlu0 14
    %1443 = vperm.xlu0 %1442, %v56
    %v1444 = vpop.permute.xlu0 %1443
    %1445 = vset.pattern.permute.xlu0 14
    %1446 = vperm.xlu0 %1445, %v57
    %v1447 = vpop.permute.xlu0 %1446
    %1448 = vset.pattern.permute.xlu0 14
    %1449 = vperm.xlu0 %1448, %v58
    %v1450 = vpop.permute.xlu0 %1449
    %1451 = vset.pattern.permute.xlu0 14
    %1452 = vperm.xlu0 %1451, %v59
    %v1453 = vpop.permute.xlu0 %1452
    %vm1454 = vcmp.eq.s32.totalorder %v1408, %v61
    %vm1455 = vcmp.eq.s32.totalorder %v1411, %v61
    %vm1456 = vcmp.eq.s32.totalorder %v1414, %v61
    %vm1457 = vcmp.eq.s32.totalorder %v1417, %v61
    %vm1458 = vcmp.eq.s32.totalorder %v1420, %v61
    %vm1459 = vcmp.eq.s32.totalorder %v1423, %v61
    %vm1460 = vcmp.eq.s32.totalorder %v1426, %v61
    %vm1461 = vcmp.eq.s32.totalorder %v1429, %v61
    %vm1462 = vcmp.eq.s32.totalorder %v1432, %v61
    %vm1463 = vcmp.eq.s32.totalorder %v1435, %v61
    %vm1464 = vcmp.eq.s32.totalorder %v1438, %v61
    %vm1465 = vcmp.eq.s32.totalorder %v1441, %v61
    %vm1466 = vcmp.eq.s32.totalorder %v1444, %v61
    %vm1467 = vcmp.eq.s32.totalorder %v1447, %v61
    %vm1468 = vcmp.eq.s32.totalorder %v1450, %v61
    %vm1469 = vcmp.eq.s32.totalorder %v1453, %v61
    %v1470 = vsel %vm1454, 1.0, 0.0
    %v1471 = vsel %vm1455, 1.0, 0.0
    %v1472 = vsel %vm1456, 1.0, 0.0
    %v1473 = vsel %vm1457, 1.0, 0.0
    %v1474 = vsel %vm1458, 1.0, 0.0
    %v1475 = vsel %vm1459, 1.0, 0.0
    %v1476 = vsel %vm1460, 1.0, 0.0
    %v1477 = vsel %vm1461, 1.0, 0.0
    %v1478 = vsel %vm1462, 1.0, 0.0
    %v1479 = vsel %vm1463, 1.0, 0.0
    %v1480 = vsel %vm1464, 1.0, 0.0
    %v1481 = vsel %vm1465, 1.0, 0.0
    %v1482 = vsel %vm1466, 1.0, 0.0
    %v1483 = vsel %vm1467, 1.0, 0.0
    %v1484 = vsel %vm1468, 1.0, 0.0
    %v1485 = vsel %vm1469, 1.0, 0.0
    %v1486 = vadd.f32 %v1390, %v1470
    %v1487 = vadd.f32 %v1391, %v1471
    %v1488 = vadd.f32 %v1392, %v1472
    %v1489 = vadd.f32 %v1393, %v1473
    %v1490 = vadd.f32 %v1394, %v1474
    %v1491 = vadd.f32 %v1395, %v1475
    %v1492 = vadd.f32 %v1396, %v1476
    %v1493 = vadd.f32 %v1397, %v1477
    %v1494 = vadd.f32 %v1398, %v1478
    %v1495 = vadd.f32 %v1399, %v1479
    %v1496 = vadd.f32 %v1400, %v1480
    %v1497 = vadd.f32 %v1401, %v1481
    %v1498 = vadd.f32 %v1402, %v1482
    %v1499 = vadd.f32 %v1403, %v1483
    %v1500 = vadd.f32 %v1404, %v1484
    %v1501 = vadd.f32 %v1405, %v1485
    %1502 = vset.pattern.permute.xlu0 15
    %1503 = vperm.xlu0 %1502, %v44
    %v1504 = vpop.permute.xlu0 %1503
    %1505 = vset.pattern.permute.xlu0 15
    %1506 = vperm.xlu0 %1505, %v45
    %v1507 = vpop.permute.xlu0 %1506
    %1508 = vset.pattern.permute.xlu0 15
    %1509 = vperm.xlu0 %1508, %v46
    %v1510 = vpop.permute.xlu0 %1509
    %1511 = vset.pattern.permute.xlu0 15
    %1512 = vperm.xlu0 %1511, %v47
    %v1513 = vpop.permute.xlu0 %1512
    %1514 = vset.pattern.permute.xlu0 15
    %1515 = vperm.xlu0 %1514, %v48
    %v1516 = vpop.permute.xlu0 %1515
    %1517 = vset.pattern.permute.xlu0 15
    %1518 = vperm.xlu0 %1517, %v49
    %v1519 = vpop.permute.xlu0 %1518
    %1520 = vset.pattern.permute.xlu0 15
    %1521 = vperm.xlu0 %1520, %v50
    %v1522 = vpop.permute.xlu0 %1521
    %1523 = vset.pattern.permute.xlu0 15
    %1524 = vperm.xlu0 %1523, %v51
    %v1525 = vpop.permute.xlu0 %1524
    %1526 = vset.pattern.permute.xlu0 15
    %1527 = vperm.xlu0 %1526, %v52
    %v1528 = vpop.permute.xlu0 %1527
    %1529 = vset.pattern.permute.xlu0 15
    %1530 = vperm.xlu0 %1529, %v53
    %v1531 = vpop.permute.xlu0 %1530
    %1532 = vset.pattern.permute.xlu0 15
    %1533 = vperm.xlu0 %1532, %v54
    %v1534 = vpop.permute.xlu0 %1533
    %1535 = vset.pattern.permute.xlu0 15
    %1536 = vperm.xlu0 %1535, %v55
    %v1537 = vpop.permute.xlu0 %1536
    %1538 = vset.pattern.permute.xlu0 15
    %1539 = vperm.xlu0 %1538, %v56
    %v1540 = vpop.permute.xlu0 %1539
    %1541 = vset.pattern.permute.xlu0 15
    %1542 = vperm.xlu0 %1541, %v57
    %v1543 = vpop.permute.xlu0 %1542
    %1544 = vset.pattern.permute.xlu0 15
    %1545 = vperm.xlu0 %1544, %v58
    %v1546 = vpop.permute.xlu0 %1545
    %1547 = vset.pattern.permute.xlu0 15
    %1548 = vperm.xlu0 %1547, %v59
    %v1549 = vpop.permute.xlu0 %1548
    %vm1550 = vcmp.eq.s32.totalorder %v1504, %v61
    %vm1551 = vcmp.eq.s32.totalorder %v1507, %v61
    %vm1552 = vcmp.eq.s32.totalorder %v1510, %v61
    %vm1553 = vcmp.eq.s32.totalorder %v1513, %v61
    %vm1554 = vcmp.eq.s32.totalorder %v1516, %v61
    %vm1555 = vcmp.eq.s32.totalorder %v1519, %v61
    %vm1556 = vcmp.eq.s32.totalorder %v1522, %v61
    %vm1557 = vcmp.eq.s32.totalorder %v1525, %v61
    %vm1558 = vcmp.eq.s32.totalorder %v1528, %v61
    %vm1559 = vcmp.eq.s32.totalorder %v1531, %v61
    %vm1560 = vcmp.eq.s32.totalorder %v1534, %v61
    %vm1561 = vcmp.eq.s32.totalorder %v1537, %v61
    %vm1562 = vcmp.eq.s32.totalorder %v1540, %v61
    %vm1563 = vcmp.eq.s32.totalorder %v1543, %v61
    %vm1564 = vcmp.eq.s32.totalorder %v1546, %v61
    %vm1565 = vcmp.eq.s32.totalorder %v1549, %v61
    %v1566 = vsel %vm1550, 1.0, 0.0
    %v1567 = vsel %vm1551, 1.0, 0.0
    %v1568 = vsel %vm1552, 1.0, 0.0
    %v1569 = vsel %vm1553, 1.0, 0.0
    %v1570 = vsel %vm1554, 1.0, 0.0
    %v1571 = vsel %vm1555, 1.0, 0.0
    %v1572 = vsel %vm1556, 1.0, 0.0
    %v1573 = vsel %vm1557, 1.0, 0.0
    %v1574 = vsel %vm1558, 1.0, 0.0
    %v1575 = vsel %vm1559, 1.0, 0.0
    %v1576 = vsel %vm1560, 1.0, 0.0
    %v1577 = vsel %vm1561, 1.0, 0.0
    %v1578 = vsel %vm1562, 1.0, 0.0
    %v1579 = vsel %vm1563, 1.0, 0.0
    %v1580 = vsel %vm1564, 1.0, 0.0
    %v1581 = vsel %vm1565, 1.0, 0.0
    %v1582 = vadd.f32 %v1486, %v1566
    %v1583 = vadd.f32 %v1487, %v1567
    %v1584 = vadd.f32 %v1488, %v1568
    %v1585 = vadd.f32 %v1489, %v1569
    %v1586 = vadd.f32 %v1490, %v1570
    %v1587 = vadd.f32 %v1491, %v1571
    %v1588 = vadd.f32 %v1492, %v1572
    %v1589 = vadd.f32 %v1493, %v1573
    %v1590 = vadd.f32 %v1494, %v1574
    %v1591 = vadd.f32 %v1495, %v1575
    %v1592 = vadd.f32 %v1496, %v1576
    %v1593 = vadd.f32 %v1497, %v1577
    %v1594 = vadd.f32 %v1498, %v1578
    %v1595 = vadd.f32 %v1499, %v1579
    %v1596 = vadd.f32 %v1500, %v1580
    %v1597 = vadd.f32 %v1501, %v1581
    %v1598 = vld [vmem:[%s1] sm:$0xff]
    %v1599 = vld [vmem:[%s1 + $0x8] sm:$0xff]
    %v1600 = vld [vmem:[%s1 + $0x10] sm:$0xff]
    %v1601 = vld [vmem:[%s1 + $0x18] sm:$0xff]
    %v1602 = vld [vmem:[%s1 + $0x20] sm:$0xff]
    %v1603 = vld [vmem:[%s1 + $0x28] sm:$0xff]
    %v1604 = vld [vmem:[%s1 + $0x30] sm:$0xff]
    %v1605 = vld [vmem:[%s1 + $0x38] sm:$0xff]
    %v1606 = vld [vmem:[%s1 + $0x40] sm:$0xff]
    %v1607 = vld [vmem:[%s1 + $0x48] sm:$0xff]
    %v1608 = vld [vmem:[%s1 + $0x50] sm:$0xff]
    %v1609 = vld [vmem:[%s1 + $0x58] sm:$0xff]
    %v1610 = vld [vmem:[%s1 + $0x60] sm:$0xf]
    %vm1611 = vcmask 818176
    %v1613 = vsel %vm1611, %v1582, 0
    %v1616 = vsel %vm1611, %v1583, 0
    %v1619 = vsel %vm1611, %v1584, 0
    %v1622 = vsel %vm1611, %v1585, 0
    %v1625 = vsel %vm1611, %v1586, 0
    %v1628 = vsel %vm1611, %v1587, 0
    %v1631 = vsel %vm1611, %v1588, 0
    %v1634 = vsel %vm1611, %v1589, 0
    %v1637 = vsel %vm1611, %v1590, 0
    %v1640 = vsel %vm1611, %v1591, 0
    %v1643 = vsel %vm1611, %v1592, 0
    %v1646 = vsel %vm1611, %v1593, 0
    %v1649 = vsel %vm1611, %v1594, 0
    %v1652 = vsel %vm1611, %v1595, 0
    %v1655 = vsel %vm1611, %v1596, 0
    %v1658 = vsel %vm1611, %v1597, 0
    %vm1660 = vcmask 1043456
    %v1662 = vsel %vm1660, %v1610, 0
    %1664 = vmatprep.subr.mxu0 0.0
    %1665 = vmatpush1.msra.mxu0 0.0
    %1666 = vmatprep.subr.mxu0 0.0
    %1667 = vmatpush1.msra.mxu0 0.0
    %1668 = vmatprep.subr.mxu0 0.0
    %1669 = vmatpush1.msra.mxu0 0.0
    %1670 = vmatprep.subr.mxu0 0.0
    %1671 = vmatpush1.msra.mxu0 %v1662
    %1672 = vmatprep.subr.mxu0 0.0
    %1673 = vmatpush1.msra.mxu0 %v1609
    %1674 = vmatprep.subr.mxu0 0.0
    %1675 = vmatpush1.msra.mxu0 %v1608
    %1676 = vmatprep.subr.mxu0 0.0
    %1677 = vmatpush1.msra.mxu0 %v1607
    %1678 = vmatprep.subr.mxu0 0.0
    %1679 = vmatpush1.msra.mxu0 %v1606
    %1680 = vmatprep.subr.mxu0 0.0
    %1681 = vmatpush1.msra.mxu0 %v1605
    %1682 = vmatprep.subr.mxu0 0.0
    %1683 = vmatpush1.msra.mxu0 %v1604
    %1684 = vmatprep.subr.mxu0 0.0
    %1685 = vmatpush1.msra.mxu0 %v1603
    %1686 = vmatprep.subr.mxu0 0.0
    %1687 = vmatpush1.msra.mxu0 %v1602
    %1688 = vmatprep.subr.mxu0 0.0
    %1689 = vmatpush1.msra.mxu0 %v1601
    %1690 = vmatprep.subr.mxu0 0.0
    %1691 = vmatpush1.msra.mxu0 %v1600
    %1692 = vmatprep.subr.mxu0 0.0
    %1693 = vmatpush1.msra.mxu0 %v1599
    %1694 = vmatprep.subr.mxu0 0.0
    %1695 = vmatpush1.msra.mxu0 %v1598
    %1696 = vmatprep.subr.mxu0 0.0
    %1697 = vmatpush2.msra.mxu0 0.0
    %1698 = vmatprep.subr.mxu0 0.0
    %1699 = vmatpush2.msra.mxu0 0.0
    %1700 = vmatprep.subr.mxu0 0.0
    %1701 = vmatpush2.msra.mxu0 0.0
    %1702 = vmatprep.subr.mxu0 0.0
    %1703 = vmatpush2.msra.mxu0 0.0
    %1704 = vmatprep.subr.mxu0 0.0
    %1705 = vmatpush2.msra.mxu0 0.0
    %1706 = vmatprep.subr.mxu0 0.0
    %1707 = vmatpush2.msra.mxu0 0.0
    %1708 = vmatprep.subr.mxu0 0.0
    %1709 = vmatpush2.msra.mxu0 0.0
    %1710 = vmatprep.subr.mxu0 0.0
    %1711 = vmatpush2.msra.mxu0 0.0
    %1712 = vmatprep.subr.mxu0 0.0
    %1713 = vmatpush2.msra.mxu0 0.0
    %1714 = vmatprep.subr.mxu0 0.0
    %1715 = vmatpush2.msra.mxu0 0.0
    %1716 = vmatprep.subr.mxu0 0.0
    %1717 = vmatpush2.msra.mxu0 0.0
    %1718 = vmatprep.subr.mxu0 0.0
    %1719 = vmatpush2.msra.mxu0 0.0
    %1720 = vmatprep.subr.mxu0 0.0
    %1721 = vmatpush2.msra.mxu0 0.0
    %1722 = vmatprep.subr.mxu0 0.0
    %1723 = vmatpush2.msra.mxu0 0.0
    %1724 = vmatprep.subr.mxu0 0.0
    %1725 = vmatpush2.msra.mxu0 0.0
    %1726 = vmatprep.subr.mxu0 0.0
    %1727 = vmatpush2.msra.mxu0 0.0
    %1728 = vmatprep.mubr.f32.mxu0 0.0
    %1729 = vmatmul.mubr.f32.gmra.mxu0 %v1613
    %v1730 = vpop.f32.mrf.mxu0
    %v1731 = vadd.f32 0.0, %v1730
    %v1732 = vpop.f32.mrf.mxu0
    %1733 = vmatprep.mubr.f32.mxu0 0.0
    %1734 = vmatmul.mubr.f32.gmra.mxu0 %v1616
    %v1735 = vpop.f32.mrf.mxu0
    %v1736 = vadd.f32 0.0, %v1735
    %v1737 = vpop.f32.mrf.mxu0
    %1738 = vmatprep.mubr.f32.mxu0 0.0
    %1739 = vmatmul.mubr.f32.gmra.mxu0 %v1619
    %v1740 = vpop.f32.mrf.mxu0
    %v1741 = vadd.f32 0.0, %v1740
    %v1742 = vpop.f32.mrf.mxu0
    %1743 = vmatprep.mubr.f32.mxu0 0.0
    %1744 = vmatmul.mubr.f32.gmra.mxu0 %v1622
    %v1745 = vpop.f32.mrf.mxu0
    %v1746 = vadd.f32 0.0, %v1745
    %v1747 = vpop.f32.mrf.mxu0
    %1748 = vmatprep.mubr.f32.mxu0 0.0
    %1749 = vmatmul.mubr.f32.gmra.mxu0 %v1625
    %v1750 = vpop.f32.mrf.mxu0
    %v1751 = vadd.f32 0.0, %v1750
    %v1752 = vpop.f32.mrf.mxu0
    %1753 = vmatprep.mubr.f32.mxu0 0.0
    %1754 = vmatmul.mubr.f32.gmra.mxu0 %v1628
    %v1755 = vpop.f32.mrf.mxu0
    %v1756 = vadd.f32 0.0, %v1755
    %v1757 = vpop.f32.mrf.mxu0
    %1758 = vmatprep.mubr.f32.mxu0 0.0
    %1759 = vmatmul.mubr.f32.gmra.mxu0 %v1631
    %v1760 = vpop.f32.mrf.mxu0
    %v1761 = vadd.f32 0.0, %v1760
    %v1762 = vpop.f32.mrf.mxu0
    %1763 = vmatprep.mubr.f32.mxu0 0.0
    %1764 = vmatmul.mubr.f32.gmra.mxu0 %v1634
    %v1765 = vpop.f32.mrf.mxu0
    %v1766 = vadd.f32 0.0, %v1765
    %v1767 = vpop.f32.mrf.mxu0
    %1768 = vmatprep.mubr.f32.mxu0 0.0
    %1769 = vmatmul.mubr.f32.gmra.mxu0 %v1637
    %v1770 = vpop.f32.mrf.mxu0
    %v1771 = vadd.f32 0.0, %v1770
    %v1772 = vpop.f32.mrf.mxu0
    %1773 = vmatprep.mubr.f32.mxu0 0.0
    %1774 = vmatmul.mubr.f32.gmra.mxu0 %v1640
    %v1775 = vpop.f32.mrf.mxu0
    %v1776 = vadd.f32 0.0, %v1775
    %v1777 = vpop.f32.mrf.mxu0
    %1778 = vmatprep.mubr.f32.mxu0 0.0
    %1779 = vmatmul.mubr.f32.gmra.mxu0 %v1643
    %v1780 = vpop.f32.mrf.mxu0
    %v1781 = vadd.f32 0.0, %v1780
    %v1782 = vpop.f32.mrf.mxu0
    %1783 = vmatprep.mubr.f32.mxu0 0.0
    %1784 = vmatmul.mubr.f32.gmra.mxu0 %v1646
    %v1785 = vpop.f32.mrf.mxu0
    %v1786 = vadd.f32 0.0, %v1785
    %v1787 = vpop.f32.mrf.mxu0
    %1788 = vmatprep.mubr.f32.mxu0 0.0
    %1789 = vmatmul.mubr.f32.gmra.mxu0 %v1649
    %v1790 = vpop.f32.mrf.mxu0
    %v1791 = vadd.f32 0.0, %v1790
    %v1792 = vpop.f32.mrf.mxu0
    %1793 = vmatprep.mubr.f32.mxu0 0.0
    %1794 = vmatmul.mubr.f32.gmra.mxu0 %v1652
    %v1795 = vpop.f32.mrf.mxu0
    %v1796 = vadd.f32 0.0, %v1795
    %v1797 = vpop.f32.mrf.mxu0
    %1798 = vmatprep.mubr.f32.mxu0 0.0
    %1799 = vmatmul.mubr.f32.gmra.mxu0 %v1655
    %v1800 = vpop.f32.mrf.mxu0
    %v1801 = vadd.f32 0.0, %v1800
    %v1802 = vpop.f32.mrf.mxu0
    %1803 = vmatprep.mubr.f32.mxu0 0.0
    %1804 = vmatmul.mubr.f32.gmra.mxu0 %v1658
    %v1805 = vpop.f32.mrf.mxu0
    %v1806 = vadd.f32 0.0, %v1805
    %v1807 = vpop.f32.mrf.mxu0
    %1808 = vdwg.mxu0
    %v1809 = vmul.f32 %v1731, 0.0625
    %v1810 = vmul.f32 %v1736, 0.0625
    %v1811 = vmul.f32 %v1741, 0.0625
    %v1812 = vmul.f32 %v1746, 0.0625
    %v1813 = vmul.f32 %v1751, 0.0625
    %v1814 = vmul.f32 %v1756, 0.0625
    %v1815 = vmul.f32 %v1761, 0.0625
    %v1816 = vmul.f32 %v1766, 0.0625
    %v1817 = vmul.f32 %v1771, 0.0625
    %v1818 = vmul.f32 %v1776, 0.0625
    %v1819 = vmul.f32 %v1781, 0.0625
    %v1820 = vmul.f32 %v1786, 0.0625
    %v1821 = vmul.f32 %v1791, 0.0625
    %v1822 = vmul.f32 %v1796, 0.0625
    %v1823 = vmul.f32 %v1801, 0.0625
    %v1824 = vmul.f32 %v1806, 0.0625
    %v1825 = vld [vmem:[#allocation2] sm:$0xff]
    %v1826 = vld [vmem:[#allocation2 + $0x8] sm:$0xff]
    %v1827 = vld [vmem:[#allocation2 + $0x10] sm:$0xff]
    %v1828 = vld [vmem:[#allocation2 + $0x18] sm:$0xff]
    %v1829 = vld [vmem:[#allocation2 + $0x20] sm:$0xff]
    %v1830 = vld [vmem:[#allocation2 + $0x28] sm:$0xff]
    %v1831 = vld [vmem:[#allocation2 + $0x30] sm:$0xff]
    %v1832 = vld [vmem:[#allocation2 + $0x38] sm:$0xff]
    %v1833 = vld [vmem:[%s3] sm:$0x1]
    %v1835 = vlaneseq
    %v1836 = vshrl.u32 %v1835, 7
    %v1837 = vsub.s32 0, %v1836
    %v1838 = vrot.slane %v1833, %v1837
    %vm1840 = vcmask 523264
    %v1842 = vsel %vm1840, %v1809, 0
    %v1845 = vsel %vm1840, %v1810, 0
    %v1848 = vsel %vm1840, %v1811, 0
    %v1851 = vsel %vm1840, %v1812, 0
    %v1854 = vsel %vm1840, %v1813, 0
    %v1857 = vsel %vm1840, %v1814, 0
    %v1860 = vsel %vm1840, %v1815, 0
    %v1863 = vsel %vm1840, %v1816, 0
    %v1866 = vsel %vm1840, %v1817, 0
    %v1869 = vsel %vm1840, %v1818, 0
    %v1872 = vsel %vm1840, %v1819, 0
    %v1875 = vsel %vm1840, %v1820, 0
    %v1878 = vsel %vm1840, %v1821, 0
    %v1881 = vsel %vm1840, %v1822, 0
    %v1884 = vsel %vm1840, %v1823, 0
    %v1887 = vsel %vm1840, %v1824, 0
    %1889 = vmatprep.subr.mxu0 0.0
    %1890 = vmatpush1.msra.mxu0 0.0
    %1891 = vmatprep.subr.mxu0 0.0
    %1892 = vmatpush1.msra.mxu0 0.0
    %1893 = vmatprep.subr.mxu0 0.0
    %1894 = vmatpush1.msra.mxu0 0.0
    %1895 = vmatprep.subr.mxu0 0.0
    %1896 = vmatpush1.msra.mxu0 0.0
    %1897 = vmatprep.subr.mxu0 0.0
    %1898 = vmatpush1.msra.mxu0 0.0
    %1899 = vmatprep.subr.mxu0 0.0
    %1900 = vmatpush1.msra.mxu0 0.0
    %1901 = vmatprep.subr.mxu0 0.0
    %1902 = vmatpush1.msra.mxu0 0.0
    %1903 = vmatprep.subr.mxu0 0.0
    %1904 = vmatpush1.msra.mxu0 0.0
    %1905 = vmatprep.subr.mxu0 0.0
    %1906 = vmatpush1.msra.mxu0 %v1832
    %1907 = vmatprep.subr.mxu0 0.0
    %1908 = vmatpush1.msra.mxu0 %v1831
    %1909 = vmatprep.subr.mxu0 0.0
    %1910 = vmatpush1.msra.mxu0 %v1830
    %1911 = vmatprep.subr.mxu0 0.0
    %1912 = vmatpush1.msra.mxu0 %v1829
    %1913 = vmatprep.subr.mxu0 0.0
    %1914 = vmatpush1.msra.mxu0 %v1828
    %1915 = vmatprep.subr.mxu0 0.0
    %1916 = vmatpush1.msra.mxu0 %v1827
    %1917 = vmatprep.subr.mxu0 0.0
    %1918 = vmatpush1.msra.mxu0 %v1826
    %1919 = vmatprep.subr.mxu0 0.0
    %1920 = vmatpush1.msra.mxu0 %v1825
    %1921 = vmatprep.subr.mxu0 0.0
    %1922 = vmatpush2.msra.mxu0 0.0
    %1923 = vmatprep.subr.mxu0 0.0
    %1924 = vmatpush2.msra.mxu0 0.0
    %1925 = vmatprep.subr.mxu0 0.0
    %1926 = vmatpush2.msra.mxu0 0.0
    %1927 = vmatprep.subr.mxu0 0.0
    %1928 = vmatpush2.msra.mxu0 0.0
    %1929 = vmatprep.subr.mxu0 0.0
    %1930 = vmatpush2.msra.mxu0 0.0
    %1931 = vmatprep.subr.mxu0 0.0
    %1932 = vmatpush2.msra.mxu0 0.0
    %1933 = vmatprep.subr.mxu0 0.0
    %1934 = vmatpush2.msra.mxu0 0.0
    %1935 = vmatprep.subr.mxu0 0.0
    %1936 = vmatpush2.msra.mxu0 0.0
    %1937 = vmatprep.subr.mxu0 0.0
    %1938 = vmatpush2.msra.mxu0 0.0
    %1939 = vmatprep.subr.mxu0 0.0
    %1940 = vmatpush2.msra.mxu0 0.0
    %1941 = vmatprep.subr.mxu0 0.0
    %1942 = vmatpush2.msra.mxu0 0.0
    %1943 = vmatprep.subr.mxu0 0.0
    %1944 = vmatpush2.msra.mxu0 0.0
    %1945 = vmatprep.subr.mxu0 0.0
    %1946 = vmatpush2.msra.mxu0 0.0
    %1947 = vmatprep.subr.mxu0 0.0
    %1948 = vmatpush2.msra.mxu0 0.0
    %1949 = vmatprep.subr.mxu0 0.0
    %1950 = vmatpush2.msra.mxu0 0.0
    %1951 = vmatprep.subr.mxu0 0.0
    %1952 = vmatpush2.msra.mxu0 0.0
    %1953 = vmatprep.mubr.f32.mxu0 0.0
    %1954 = vmatmul.mubr.f32.gmra.mxu0 %v1842
    %v1955 = vpop.f32.mrf.mxu0
    %v1956 = vadd.f32 %v1838, %v1955
    %v1957 = vpop.f32.mrf.mxu0
    %1958 = vmatprep.mubr.f32.mxu0 0.0
    %1959 = vmatmul.mubr.f32.gmra.mxu0 %v1845
    %v1960 = vpop.f32.mrf.mxu0
    %v1961 = vadd.f32 %v1838, %v1960
    %v1962 = vpop.f32.mrf.mxu0
    %1963 = vmatprep.mubr.f32.mxu0 0.0
    %1964 = vmatmul.mubr.f32.gmra.mxu0 %v1848
    %v1965 = vpop.f32.mrf.mxu0
    %v1966 = vadd.f32 %v1838, %v1965
    %v1967 = vpop.f32.mrf.mxu0
    %1968 = vmatprep.mubr.f32.mxu0 0.0
    %1969 = vmatmul.mubr.f32.gmra.mxu0 %v1851
    %v1970 = vpop.f32.mrf.mxu0
    %v1971 = vadd.f32 %v1838, %v1970
    %v1972 = vpop.f32.mrf.mxu0
    %1973 = vmatprep.mubr.f32.mxu0 0.0
    %1974 = vmatmul.mubr.f32.gmra.mxu0 %v1854
    %v1975 = vpop.f32.mrf.mxu0
    %v1976 = vadd.f32 %v1838, %v1975
    %v1977 = vpop.f32.mrf.mxu0
    %1978 = vmatprep.mubr.f32.mxu0 0.0
    %1979 = vmatmul.mubr.f32.gmra.mxu0 %v1857
    %v1980 = vpop.f32.mrf.mxu0
    %v1981 = vadd.f32 %v1838, %v1980
    %v1982 = vpop.f32.mrf.mxu0
    %1983 = vmatprep.mubr.f32.mxu0 0.0
    %1984 = vmatmul.mubr.f32.gmra.mxu0 %v1860
    %v1985 = vpop.f32.mrf.mxu0
    %v1986 = vadd.f32 %v1838, %v1985
    %v1987 = vpop.f32.mrf.mxu0
    %1988 = vmatprep.mubr.f32.mxu0 0.0
    %1989 = vmatmul.mubr.f32.gmra.mxu0 %v1863
    %v1990 = vpop.f32.mrf.mxu0
    %v1991 = vadd.f32 %v1838, %v1990
    %v1992 = vpop.f32.mrf.mxu0
    %1993 = vmatprep.mubr.f32.mxu0 0.0
    %1994 = vmatmul.mubr.f32.gmra.mxu0 %v1866
    %v1995 = vpop.f32.mrf.mxu0
    %v1996 = vadd.f32 %v1838, %v1995
    %v1997 = vpop.f32.mrf.mxu0
    %1998 = vmatprep.mubr.f32.mxu0 0.0
    %1999 = vmatmul.mubr.f32.gmra.mxu0 %v1869
    %v2000 = vpop.f32.mrf.mxu0
    %v2001 = vadd.f32 %v1838, %v2000
    %v2002 = vpop.f32.mrf.mxu0
    %2003 = vmatprep.mubr.f32.mxu0 0.0
    %2004 = vmatmul.mubr.f32.gmra.mxu0 %v1872
    %v2005 = vpop.f32.mrf.mxu0
    %v2006 = vadd.f32 %v1838, %v2005
    %v2007 = vpop.f32.mrf.mxu0
    %2008 = vmatprep.mubr.f32.mxu0 0.0
    %2009 = vmatmul.mubr.f32.gmra.mxu0 %v1875
    %v2010 = vpop.f32.mrf.mxu0
    %v2011 = vadd.f32 %v1838, %v2010
    %v2012 = vpop.f32.mrf.mxu0
    %2013 = vmatprep.mubr.f32.mxu0 0.0
    %2014 = vmatmul.mubr.f32.gmra.mxu0 %v1878
    %v2015 = vpop.f32.mrf.mxu0
    %v2016 = vadd.f32 %v1838, %v2015
    %v2017 = vpop.f32.mrf.mxu0
    %2018 = vmatprep.mubr.f32.mxu0 0.0
    %2019 = vmatmul.mubr.f32.gmra.mxu0 %v1881
    %v2020 = vpop.f32.mrf.mxu0
    %v2021 = vadd.f32 %v1838, %v2020
    %v2022 = vpop.f32.mrf.mxu0
    %2023 = vmatprep.mubr.f32.mxu0 0.0
    %2024 = vmatmul.mubr.f32.gmra.mxu0 %v1884
    %v2025 = vpop.f32.mrf.mxu0
    %v2026 = vadd.f32 %v1838, %v2025
    %v2027 = vpop.f32.mrf.mxu0
    %2028 = vmatprep.mubr.f32.mxu0 0.0
    %2029 = vmatmul.mubr.f32.gmra.mxu0 %v1887
    %v2030 = vpop.f32.mrf.mxu0
    %v2031 = vadd.f32 %v1838, %v2030
    %v2032 = vpop.f32.mrf.mxu0
    %2033 = vdwg.mxu0
    %v2034 = vmax.f32 %v1956, 0.0
    %v2035 = vmax.f32 %v1961, 0.0
    %v2036 = vmax.f32 %v1966, 0.0
    %v2037 = vmax.f32 %v1971, 0.0
    %v2038 = vmax.f32 %v1976, 0.0
    %v2039 = vmax.f32 %v1981, 0.0
    %v2040 = vmax.f32 %v1986, 0.0
    %v2041 = vmax.f32 %v1991, 0.0
    %v2042 = vmax.f32 %v1996, 0.0
    %v2043 = vmax.f32 %v2001, 0.0
    %v2044 = vmax.f32 %v2006, 0.0
    %v2045 = vmax.f32 %v2011, 0.0
    %v2046 = vmax.f32 %v2016, 0.0
    %v2047 = vmax.f32 %v2021, 0.0
    %v2048 = vmax.f32 %v2026, 0.0
    %v2049 = vmax.f32 %v2031, 0.0
    %v2050 = vld [vmem:[%s4] sm:$0xff]
    %v2051 = vld [vmem:[%s4 + $0x8] sm:$0xff]
    %v2052 = vld [vmem:[%s4 + $0x10] sm:$0xff]
    %v2053 = vld [vmem:[%s4 + $0x18] sm:$0xff]
    %v2054 = vld [vmem:[%s4 + $0x20] sm:$0xff]
    %v2055 = vld [vmem:[%s4 + $0x28] sm:$0xff]
    %v2056 = vld [vmem:[%s4 + $0x30] sm:$0xff]
    %v2057 = vld [vmem:[%s4 + $0x38] sm:$0xff]
    %v2058 = vld [vmem:[%s4 + $0x40] sm:$0xff]
    %v2059 = vld [vmem:[%s4 + $0x48] sm:$0xff]
    %v2060 = vld [vmem:[%s4 + $0x50] sm:$0xff]
    %v2061 = vld [vmem:[%s4 + $0x58] sm:$0xff]
    %v2062 = vld [vmem:[%s4 + $0x60] sm:$0xff]
    %v2063 = vld [vmem:[%s4 + $0x68] sm:$0xff]
    %v2064 = vld [vmem:[%s4 + $0x70] sm:$0xff]
    %v2065 = vld [vmem:[%s4 + $0x78] sm:$0xff]
    %v2066 = vld [vmem:[%s5] sm:$0x1]
    %v2068 = vlaneseq
    %v2069 = vshrl.u32 %v2068, 7
    %v2070 = vsub.s32 0, %v2069
    %v2071 = vrot.slane %v2066, %v2070
    %2073 = vmatprep.subr.mxu0 0.0
    %2074 = vmatpush1.msra.mxu0 %v2065
    %2075 = vmatprep.subr.mxu0 0.0
    %2076 = vmatpush1.msra.mxu0 %v2064
    %2077 = vmatprep.subr.mxu0 0.0
    %2078 = vmatpush1.msra.mxu0 %v2063
    %2079 = vmatprep.subr.mxu0 0.0
    %2080 = vmatpush1.msra.mxu0 %v2062
    %2081 = vmatprep.subr.mxu0 0.0
    %2082 = vmatpush1.msra.mxu0 %v2061
    %2083 = vmatprep.subr.mxu0 0.0
    %2084 = vmatpush1.msra.mxu0 %v2060
    %2085 = vmatprep.subr.mxu0 0.0
    %2086 = vmatpush1.msra.mxu0 %v2059
    %2087 = vmatprep.subr.mxu0 0.0
    %2088 = vmatpush1.msra.mxu0 %v2058
    %2089 = vmatprep.subr.mxu0 0.0
    %2090 = vmatpush1.msra.mxu0 %v2057
    %2091 = vmatprep.subr.mxu0 0.0
    %2092 = vmatpush1.msra.mxu0 %v2056
    %2093 = vmatprep.subr.mxu0 0.0
    %2094 = vmatpush1.msra.mxu0 %v2055
    %2095 = vmatprep.subr.mxu0 0.0
    %2096 = vmatpush1.msra.mxu0 %v2054
    %2097 = vmatprep.subr.mxu0 0.0
    %2098 = vmatpush1.msra.mxu0 %v2053
    %2099 = vmatprep.subr.mxu0 0.0
    %2100 = vmatpush1.msra.mxu0 %v2052
    %2101 = vmatprep.subr.mxu0 0.0
    %2102 = vmatpush1.msra.mxu0 %v2051
    %2103 = vmatprep.subr.mxu0 0.0
    %2104 = vmatpush1.msra.mxu0 %v2050
    %2105 = vmatprep.subr.mxu0 0.0
    %2106 = vmatpush2.msra.mxu0 0.0
    %2107 = vmatprep.subr.mxu0 0.0
    %2108 = vmatpush2.msra.mxu0 0.0
    %2109 = vmatprep.subr.mxu0 0.0
    %2110 = vmatpush2.msra.mxu0 0.0
    %2111 = vmatprep.subr.mxu0 0.0
    %2112 = vmatpush2.msra.mxu0 0.0
    %2113 = vmatprep.subr.mxu0 0.0
    %2114 = vmatpush2.msra.mxu0 0.0
    %2115 = vmatprep.subr.mxu0 0.0
    %2116 = vmatpush2.msra.mxu0 0.0
    %2117 = vmatprep.subr.mxu0 0.0
    %2118 = vmatpush2.msra.mxu0 0.0
    %2119 = vmatprep.subr.mxu0 0.0
    %2120 = vmatpush2.msra.mxu0 0.0
    %2121 = vmatprep.subr.mxu0 0.0
    %2122 = vmatpush2.msra.mxu0 0.0
    %2123 = vmatprep.subr.mxu0 0.0
    %2124 = vmatpush2.msra.mxu0 0.0
    %2125 = vmatprep.subr.mxu0 0.0
    %2126 = vmatpush2.msra.mxu0 0.0
    %2127 = vmatprep.subr.mxu0 0.0
    %2128 = vmatpush2.msra.mxu0 0.0
    %2129 = vmatprep.subr.mxu0 0.0
    %2130 = vmatpush2.msra.mxu0 0.0
    %2131 = vmatprep.subr.mxu0 0.0
    %2132 = vmatpush2.msra.mxu0 0.0
    %2133 = vmatprep.subr.mxu0 0.0
    %2134 = vmatpush2.msra.mxu0 0.0
    %2135 = vmatprep.subr.mxu0 0.0
    %2136 = vmatpush2.msra.mxu0 0.0
    %2137 = vmatprep.mubr.f32.mxu0 0.0
    %2138 = vmatmul.mubr.f32.gmra.mxu0 %v2034
    %v2139 = vpop.f32.mrf.mxu0
    %v2140 = vadd.f32 %v2071, %v2139
    %v2141 = vpop.f32.mrf.mxu0
    %2142 = vmatprep.mubr.f32.mxu0 0.0
    %2143 = vmatmul.mubr.f32.gmra.mxu0 %v2035
    %v2144 = vpop.f32.mrf.mxu0
    %v2145 = vadd.f32 %v2071, %v2144
    %v2146 = vpop.f32.mrf.mxu0
    %2147 = vmatprep.mubr.f32.mxu0 0.0
    %2148 = vmatmul.mubr.f32.gmra.mxu0 %v2036
    %v2149 = vpop.f32.mrf.mxu0
    %v2150 = vadd.f32 %v2071, %v2149
    %v2151 = vpop.f32.mrf.mxu0
    %2152 = vmatprep.mubr.f32.mxu0 0.0
    %2153 = vmatmul.mubr.f32.gmra.mxu0 %v2037
    %v2154 = vpop.f32.mrf.mxu0
    %v2155 = vadd.f32 %v2071, %v2154
    %v2156 = vpop.f32.mrf.mxu0
    %2157 = vmatprep.mubr.f32.mxu0 0.0
    %2158 = vmatmul.mubr.f32.gmra.mxu0 %v2038
    %v2159 = vpop.f32.mrf.mxu0
    %v2160 = vadd.f32 %v2071, %v2159
    %v2161 = vpop.f32.mrf.mxu0
    %2162 = vmatprep.mubr.f32.mxu0 0.0
    %2163 = vmatmul.mubr.f32.gmra.mxu0 %v2039
    %v2164 = vpop.f32.mrf.mxu0
    %v2165 = vadd.f32 %v2071, %v2164
    %v2166 = vpop.f32.mrf.mxu0
    %2167 = vmatprep.mubr.f32.mxu0 0.0
    %2168 = vmatmul.mubr.f32.gmra.mxu0 %v2040
    %v2169 = vpop.f32.mrf.mxu0
    %v2170 = vadd.f32 %v2071, %v2169
    %v2171 = vpop.f32.mrf.mxu0
    %2172 = vmatprep.mubr.f32.mxu0 0.0
    %2173 = vmatmul.mubr.f32.gmra.mxu0 %v2041
    %v2174 = vpop.f32.mrf.mxu0
    %v2175 = vadd.f32 %v2071, %v2174
    %v2176 = vpop.f32.mrf.mxu0
    %2177 = vmatprep.mubr.f32.mxu0 0.0
    %2178 = vmatmul.mubr.f32.gmra.mxu0 %v2042
    %v2179 = vpop.f32.mrf.mxu0
    %v2180 = vadd.f32 %v2071, %v2179
    %v2181 = vpop.f32.mrf.mxu0
    %2182 = vmatprep.mubr.f32.mxu0 0.0
    %2183 = vmatmul.mubr.f32.gmra.mxu0 %v2043
    %v2184 = vpop.f32.mrf.mxu0
    %v2185 = vadd.f32 %v2071, %v2184
    %v2186 = vpop.f32.mrf.mxu0
    %2187 = vmatprep.mubr.f32.mxu0 0.0
    %2188 = vmatmul.mubr.f32.gmra.mxu0 %v2044
    %v2189 = vpop.f32.mrf.mxu0
    %v2190 = vadd.f32 %v2071, %v2189
    %v2191 = vpop.f32.mrf.mxu0
    %2192 = vmatprep.mubr.f32.mxu0 0.0
    %2193 = vmatmul.mubr.f32.gmra.mxu0 %v2045
    %v2194 = vpop.f32.mrf.mxu0
    %v2195 = vadd.f32 %v2071, %v2194
    %v2196 = vpop.f32.mrf.mxu0
    %2197 = vmatprep.mubr.f32.mxu0 0.0
    %2198 = vmatmul.mubr.f32.gmra.mxu0 %v2046
    %v2199 = vpop.f32.mrf.mxu0
    %v2200 = vadd.f32 %v2071, %v2199
    %v2201 = vpop.f32.mrf.mxu0
    %2202 = vmatprep.mubr.f32.mxu0 0.0
    %2203 = vmatmul.mubr.f32.gmra.mxu0 %v2047
    %v2204 = vpop.f32.mrf.mxu0
    %v2205 = vadd.f32 %v2071, %v2204
    %v2206 = vpop.f32.mrf.mxu0
    %2207 = vmatprep.mubr.f32.mxu0 0.0
    %2208 = vmatmul.mubr.f32.gmra.mxu0 %v2048
    %v2209 = vpop.f32.mrf.mxu0
    %v2210 = vadd.f32 %v2071, %v2209
    %v2211 = vpop.f32.mrf.mxu0
    %2212 = vmatprep.mubr.f32.mxu0 0.0
    %2213 = vmatmul.mubr.f32.gmra.mxu0 %v2049
    %v2214 = vpop.f32.mrf.mxu0
    %v2215 = vadd.f32 %v2071, %v2214
    %v2216 = vpop.f32.mrf.mxu0
    %2217 = vdwg.mxu0
    %v2218 = vmax.f32 %v2140, 0.0
    %v2219 = vmax.f32 %v2145, 0.0
    %v2220 = vmax.f32 %v2150, 0.0
    %v2221 = vmax.f32 %v2155, 0.0
    %v2222 = vmax.f32 %v2160, 0.0
    %v2223 = vmax.f32 %v2165, 0.0
    %v2224 = vmax.f32 %v2170, 0.0
    %v2225 = vmax.f32 %v2175, 0.0
    %v2226 = vmax.f32 %v2180, 0.0
    %v2227 = vmax.f32 %v2185, 0.0
    %v2228 = vmax.f32 %v2190, 0.0
    %v2229 = vmax.f32 %v2195, 0.0
    %v2230 = vmax.f32 %v2200, 0.0
    %v2231 = vmax.f32 %v2205, 0.0
    %v2232 = vmax.f32 %v2210, 0.0
    %v2233 = vmax.f32 %v2215, 0.0
    %v2234 = vld [vmem:[%s6] sm:$0xff]
    %v2235 = vld [vmem:[%s6 + $0x8] sm:$0xff]
    %v2236 = vld [vmem:[%s6 + $0x10] sm:$0xff]
    %v2237 = vld [vmem:[%s6 + $0x18] sm:$0xff]
    %v2238 = vld [vmem:[%s6 + $0x20] sm:$0xff]
    %v2239 = vld [vmem:[%s6 + $0x28] sm:$0xff]
    %v2240 = vld [vmem:[%s6 + $0x30] sm:$0xff]
    %v2241 = vld [vmem:[%s6 + $0x38] sm:$0xff]
    %v2242 = vld [vmem:[%s6 + $0x40] sm:$0xff]
    %v2243 = vld [vmem:[%s6 + $0x48] sm:$0xff]
    %v2244 = vld [vmem:[%s6 + $0x50] sm:$0xff]
    %v2245 = vld [vmem:[%s6 + $0x58] sm:$0xff]
    %v2246 = vld [vmem:[%s6 + $0x60] sm:$0xff]
    %v2247 = vld [vmem:[%s6 + $0x68] sm:$0xff]
    %v2248 = vld [vmem:[%s6 + $0x70] sm:$0xff]
    %v2249 = vld [vmem:[%s6 + $0x78] sm:$0xff]
    %v2250 = vld [vmem:[%s7] sm:$0x1]
    %v2252 = vlaneseq
    %v2253 = vshrl.u32 %v2252, 7
    %v2254 = vsub.s32 0, %v2253
    %v2255 = vrot.slane %v2250, %v2254
    %2257 = vmatprep.subr.mxu0 0.0
    %2258 = vmatpush1.msra.mxu0 %v2249
    %2259 = vmatprep.subr.mxu0 0.0
    %2260 = vmatpush1.msra.mxu0 %v2248
    %2261 = vmatprep.subr.mxu0 0.0
    %2262 = vmatpush1.msra.mxu0 %v2247
    %2263 = vmatprep.subr.mxu0 0.0
    %2264 = vmatpush1.msra.mxu0 %v2246
    %2265 = vmatprep.subr.mxu0 0.0
    %2266 = vmatpush1.msra.mxu0 %v2245
    %2267 = vmatprep.subr.mxu0 0.0
    %2268 = vmatpush1.msra.mxu0 %v2244
    %2269 = vmatprep.subr.mxu0 0.0
    %2270 = vmatpush1.msra.mxu0 %v2243
    %2271 = vmatprep.subr.mxu0 0.0
    %2272 = vmatpush1.msra.mxu0 %v2242
    %2273 = vmatprep.subr.mxu0 0.0
    %2274 = vmatpush1.msra.mxu0 %v2241
    %2275 = vmatprep.subr.mxu0 0.0
    %2276 = vmatpush1.msra.mxu0 %v2240
    %2277 = vmatprep.subr.mxu0 0.0
    %2278 = vmatpush1.msra.mxu0 %v2239
    %2279 = vmatprep.subr.mxu0 0.0
    %2280 = vmatpush1.msra.mxu0 %v2238
    %2281 = vmatprep.subr.mxu0 0.0
    %2282 = vmatpush1.msra.mxu0 %v2237
    %2283 = vmatprep.subr.mxu0 0.0
    %2284 = vmatpush1.msra.mxu0 %v2236
    %2285 = vmatprep.subr.mxu0 0.0
    %2286 = vmatpush1.msra.mxu0 %v2235
    %2287 = vmatprep.subr.mxu0 0.0
    %2288 = vmatpush1.msra.mxu0 %v2234
    %2289 = vmatprep.subr.mxu0 0.0
    %2290 = vmatpush2.msra.mxu0 0.0
    %2291 = vmatprep.subr.mxu0 0.0
    %2292 = vmatpush2.msra.mxu0 0.0
    %2293 = vmatprep.subr.mxu0 0.0
    %2294 = vmatpush2.msra.mxu0 0.0
    %2295 = vmatprep.subr.mxu0 0.0
    %2296 = vmatpush2.msra.mxu0 0.0
    %2297 = vmatprep.subr.mxu0 0.0
    %2298 = vmatpush2.msra.mxu0 0.0
    %2299 = vmatprep.subr.mxu0 0.0
    %2300 = vmatpush2.msra.mxu0 0.0
    %2301 = vmatprep.subr.mxu0 0.0
    %2302 = vmatpush2.msra.mxu0 0.0
    %2303 = vmatprep.subr.mxu0 0.0
    %2304 = vmatpush2.msra.mxu0 0.0
    %2305 = vmatprep.subr.mxu0 0.0
    %2306 = vmatpush2.msra.mxu0 0.0
    %2307 = vmatprep.subr.mxu0 0.0
    %2308 = vmatpush2.msra.mxu0 0.0
    %2309 = vmatprep.subr.mxu0 0.0
    %2310 = vmatpush2.msra.mxu0 0.0
    %2311 = vmatprep.subr.mxu0 0.0
    %2312 = vmatpush2.msra.mxu0 0.0
    %2313 = vmatprep.subr.mxu0 0.0
    %2314 = vmatpush2.msra.mxu0 0.0
    %2315 = vmatprep.subr.mxu0 0.0
    %2316 = vmatpush2.msra.mxu0 0.0
    %2317 = vmatprep.subr.mxu0 0.0
    %2318 = vmatpush2.msra.mxu0 0.0
    %2319 = vmatprep.subr.mxu0 0.0
    %2320 = vmatpush2.msra.mxu0 0.0
    %2321 = vmatprep.mubr.f32.mxu0 0.0
    %2322 = vmatmul.mubr.f32.gmra.mxu0 %v2218
    %v2323 = vpop.f32.mrf.mxu0
    %v2324 = vadd.f32 %v2255, %v2323
    %v2325 = vpop.f32.mrf.mxu0
    %2326 = vmatprep.mubr.f32.mxu0 0.0
    %2327 = vmatmul.mubr.f32.gmra.mxu0 %v2219
    %v2328 = vpop.f32.mrf.mxu0
    %v2329 = vadd.f32 %v2255, %v2328
    %v2330 = vpop.f32.mrf.mxu0
    %2331 = vmatprep.mubr.f32.mxu0 0.0
    %2332 = vmatmul.mubr.f32.gmra.mxu0 %v2220
    %v2333 = vpop.f32.mrf.mxu0
    %v2334 = vadd.f32 %v2255, %v2333
    %v2335 = vpop.f32.mrf.mxu0
    %2336 = vmatprep.mubr.f32.mxu0 0.0
    %2337 = vmatmul.mubr.f32.gmra.mxu0 %v2221
    %v2338 = vpop.f32.mrf.mxu0
    %v2339 = vadd.f32 %v2255, %v2338
    %v2340 = vpop.f32.mrf.mxu0
    %2341 = vmatprep.mubr.f32.mxu0 0.0
    %2342 = vmatmul.mubr.f32.gmra.mxu0 %v2222
    %v2343 = vpop.f32.mrf.mxu0
    %v2344 = vadd.f32 %v2255, %v2343
    %v2345 = vpop.f32.mrf.mxu0
    %2346 = vmatprep.mubr.f32.mxu0 0.0
    %2347 = vmatmul.mubr.f32.gmra.mxu0 %v2223
    %v2348 = vpop.f32.mrf.mxu0
    %v2349 = vadd.f32 %v2255, %v2348
    %v2350 = vpop.f32.mrf.mxu0
    %2351 = vmatprep.mubr.f32.mxu0 0.0
    %2352 = vmatmul.mubr.f32.gmra.mxu0 %v2224
    %v2353 = vpop.f32.mrf.mxu0
    %v2354 = vadd.f32 %v2255, %v2353
    %v2355 = vpop.f32.mrf.mxu0
    %2356 = vmatprep.mubr.f32.mxu0 0.0
    %2357 = vmatmul.mubr.f32.gmra.mxu0 %v2225
    %v2358 = vpop.f32.mrf.mxu0
    %v2359 = vadd.f32 %v2255, %v2358
    %v2360 = vpop.f32.mrf.mxu0
    %2361 = vmatprep.mubr.f32.mxu0 0.0
    %2362 = vmatmul.mubr.f32.gmra.mxu0 %v2226
    %v2363 = vpop.f32.mrf.mxu0
    %v2364 = vadd.f32 %v2255, %v2363
    %v2365 = vpop.f32.mrf.mxu0
    %2366 = vmatprep.mubr.f32.mxu0 0.0
    %2367 = vmatmul.mubr.f32.gmra.mxu0 %v2227
    %v2368 = vpop.f32.mrf.mxu0
    %v2369 = vadd.f32 %v2255, %v2368
    %v2370 = vpop.f32.mrf.mxu0
    %2371 = vmatprep.mubr.f32.mxu0 0.0
    %2372 = vmatmul.mubr.f32.gmra.mxu0 %v2228
    %v2373 = vpop.f32.mrf.mxu0
    %v2374 = vadd.f32 %v2255, %v2373
    %v2375 = vpop.f32.mrf.mxu0
    %2376 = vmatprep.mubr.f32.mxu0 0.0
    %2377 = vmatmul.mubr.f32.gmra.mxu0 %v2229
    %v2378 = vpop.f32.mrf.mxu0
    %v2379 = vadd.f32 %v2255, %v2378
    %v2380 = vpop.f32.mrf.mxu0
    %2381 = vmatprep.mubr.f32.mxu0 0.0
    %2382 = vmatmul.mubr.f32.gmra.mxu0 %v2230
    %v2383 = vpop.f32.mrf.mxu0
    %v2384 = vadd.f32 %v2255, %v2383
    %v2385 = vpop.f32.mrf.mxu0
    %2386 = vmatprep.mubr.f32.mxu0 0.0
    %2387 = vmatmul.mubr.f32.gmra.mxu0 %v2231
    %v2388 = vpop.f32.mrf.mxu0
    %v2389 = vadd.f32 %v2255, %v2388
    %v2390 = vpop.f32.mrf.mxu0
    %2391 = vmatprep.mubr.f32.mxu0 0.0
    %2392 = vmatmul.mubr.f32.gmra.mxu0 %v2232
    %v2393 = vpop.f32.mrf.mxu0
    %v2394 = vadd.f32 %v2255, %v2393
    %v2395 = vpop.f32.mrf.mxu0
    %2396 = vmatprep.mubr.f32.mxu0 0.0
    %2397 = vmatmul.mubr.f32.gmra.mxu0 %v2233
    %v2398 = vpop.f32.mrf.mxu0
    %v2399 = vadd.f32 %v2255, %v2398
    %v2400 = vpop.f32.mrf.mxu0
    %2401 = vdwg.mxu0
    %2402 = vst [vmem:[#allocation5] sm:$0xff] %v2324
    %2403 = vst [vmem:[#allocation5 + $0x8] sm:$0xff] %v2329
    %2404 = vst [vmem:[#allocation5 + $0x10] sm:$0xff] %v2334
    %2405 = vst [vmem:[#allocation5 + $0x18] sm:$0xff] %v2339
    %2406 = vst [vmem:[#allocation5 + $0x20] sm:$0xff] %v2344
    %2407 = vst [vmem:[#allocation5 + $0x28] sm:$0xff] %v2349
    %2408 = vst [vmem:[#allocation5 + $0x30] sm:$0xff] %v2354
    %2409 = vst [vmem:[#allocation5 + $0x38] sm:$0xff] %v2359
    %2410 = vst [vmem:[#allocation5 + $0x40] sm:$0xff] %v2364
    %2411 = vst [vmem:[#allocation5 + $0x48] sm:$0xff] %v2369
    %2412 = vst [vmem:[#allocation5 + $0x50] sm:$0xff] %v2374
    %2413 = vst [vmem:[#allocation5 + $0x58] sm:$0xff] %v2379
    %2414 = vst [vmem:[#allocation5 + $0x60] sm:$0xff] %v2384
    %2415 = vst [vmem:[#allocation5 + $0x68] sm:$0xff] %v2389
    %2416 = vst [vmem:[#allocation5 + $0x70] sm:$0xff] %v2394
    %2417 = vst [vmem:[#allocation5 + $0x78] sm:$0xff] %v2399
    // Predicated region
    $region38: #{tpu_custom_call.1} parent=1 // pred_check
      _
    $region39: #{tpu_custom_call.1} parent=1 // pred_check_branch
      %2419 = sbr.rel (0) target = $region41
    $region40: #{tpu_custom_call.1} parent=1 // pred_region
      %s2421 = ssub.s32 2048, 2048
      %2422 = vsyncadd [#allocation4], %s2421
      %s2423 = sshll.u32 [#allocation5], 4
      %s2424 = int_to_ptr.vmem [resolvable:$true] %s2423
      %2429 = dma.vmem_to_hbm [thread:$0]  %s2424, 2048, %s8, [#allocation4], 128, 128, 8
    $region41: #{tpu_custom_call.1} parent=1 // pred_fallthru
      _
    // Predicated region
    $region42: #{tpu_custom_call.1} parent=1 // pred_check
      _
    $region43: #{tpu_custom_call.1} parent=1 // pred_check_branch
      %2431 = sbr.rel (0) target = $region45
    $region44: #{tpu_custom_call.1} parent=1 // pred_region
      %2432 = dma.done [#allocation4], 2048
    $region45: #{tpu_custom_call.1} parent=1 // pred_fallthru
      _
    %2433 = vsyncpa [#allocation3], 1
    %2434 = vsyncpa [#allocation4], 1

</llo_original>
